<compile_context>
chip_gen: v5e
topology: v5e:2x2
jax: 0.10.0
libtpu: 0.0.40
codegen_flags: <defaults>
</compile_context>

<pallas_src>
from functools import partial

import numpy as np
import jax
import jax.numpy as jnp
from jax.experimental import pallas as pl
from jax.experimental.pallas import tpu as pltpu

NEG_SLOPE = 0.02  # LeakyReLU negative_slope (module default)


def _round_up(x, m):
    return ((x + m - 1) // m) * m


# ----------------------------------------------------------------------------- kernel
def _fused_kernel(x_ref, w1_ref, b1_ref, w2_ref, b2_ref,
                  fc1w_ref, fc1b_ref, fc2w_ref, fc2b_ref, fc3w_ref, fc3b_ref,
                  o_ref, p_ref, *, slope):
    bt = x_ref.shape[0]

    def lrelu(t):
        return jnp.where(t >= 0.0, t, slope * t)

    # ---- conv1: ONE K=72 MXU GEMM over the host-packed mini-im2col lanes -----------
    # x_ref: (bt, 64, 72) with rows = h*8 + w, lanes = (kh*3+kw)*8 + d_in.
    xm = x_ref[...].reshape(bt * 64, 72)                       # tile-aligned row merge
    part = jnp.dot(xm, w1_ref[...], preferred_element_type=jnp.float32)   # (bt*64, 128)
    acc = part.reshape(bt, 8, 8, 128)                          # lanes = do*16 + co (96..127 = 0)

    # ---- fused MaxPool3d(1,2,2): raw maxima into a lane-aligned (bt, 1152) scratch --
    # bias + LeakyReLU hoisted to ONE pass afterwards (per-channel bias, monotone act).
    for ph in range(3):
        rmax = jnp.maximum(acc[:, 2 * ph], acc[:, 2 * ph + 1])             # (bt, 8, 128)
        for pw in range(3):
            t2 = ph * 3 + pw
            p_ref[:, t2 * 128:(t2 + 1) * 128] = jnp.maximum(rmax[:, 2 * pw],
                                                            rmax[:, 2 * pw + 1])
    p = lrelu(p_ref[...] + b1_ref[...])                        # (bt, 1152)

    # ---- conv2 + torch.flatten(x, 1) as ONE banded GEMM (out lanes = dd*32 + co) ----
    feat = lrelu(jnp.dot(p, w2_ref[...], preferred_element_type=jnp.float32)
                 + b2_ref[...])                                # (bt, 128)

    # ---- fc1 / fc2 (zero-padded to 128 out lanes) on the MXU ------------------------
    h = lrelu(jnp.dot(feat, fc1w_ref[...], preferred_element_type=jnp.float32) + fc1b_ref[...])
    h = lrelu(jnp.dot(h, fc2w_ref[...], preferred_element_type=jnp.float32) + fc2b_ref[...])

    # ---- fc3 as w3_row @ h^T -> lane-dense (1, bt) result: single unmasked row store -
    o_ref[...] = (jnp.dot(fc3w_ref[...], h.T, preferred_element_type=jnp.float32)
                  + fc3b_ref[...])


# ----------------------------------------------------------------------------- host-side weight packing
def pack_params(params):
    """One-time host packing of PyTorch-layout weights into the fused-kernel layout."""
    w1 = np.asarray(params["conv1_w"], np.float32)   # (16, 1, 3, 3, 3)  (co, cin, kd, kh, kw)
    b1 = np.asarray(params["conv1_b"], np.float32)   # (16,)
    w2 = np.asarray(params["conv2_w"], np.float32)   # (32, 16, 3, 3, 3)
    b2 = np.asarray(params["conv2_b"], np.float32)   # (32,)

    # conv1 -> single banded (72, 128) matrix; in lane = tap*8 + d_in, out lane = do*16 + co.
    w1p = np.zeros((72, 128), np.float32)
    for kh in range(3):
        for kw in range(3):
            t = kh * 3 + kw
            for do in range(6):
                for kd in range(3):
                    w1p[t * 8 + do + kd, do * 16:(do + 1) * 16] = w1[:, 0, kd, kh, kw]

    # conv1 bias tiled over the 9 pooled 128-lane blocks (bias+lrelu hoisted after pooling).
    b1blk = np.zeros((128,), np.float32)
    for do in range(6):
        b1blk[do * 16:(do + 1) * 16] = b1
    b1t = np.tile(b1blk, 9).reshape(1, 1152)

    # conv2 + channel-major flatten -> one banded (1152, 128) matrix.
    # in lane = (ph*3+pw)*128 + do*16 + cin ; out lane = dd*32 + co.
    w2p = np.zeros((1152, 128), np.float32)
    for ph in range(3):
        for pw in range(3):
            t2 = ph * 3 + pw
            for dd in range(4):
                for kd in range(3):
                    do = dd + kd
                    w2p[t2 * 128 + do * 16: t2 * 128 + (do + 1) * 16,
                        dd * 32:(dd + 1) * 32] = w2[:, :, kd, ph, pw].T
    b2e = np.tile(b2, 4).reshape(1, 128)

    # fc1 rows permuted to the kernel's (dd, co) flatten order (torch order is co*4+dd).
    idx = np.arange(128)
    perm = (idx % 32) * 4 + idx // 32
    fc1_wp = np.asarray(params["fc1_w"], np.float32)[perm, :]
    fc1_b = np.asarray(params["fc1_b"], np.float32).reshape(1, 128)

    # fc2 / fc3 padded to 128 output lanes with zeros (removes half-width lane masks).
    fc2p = np.zeros((128, 128), np.float32)
    fc2p[:, :64] = np.asarray(params["fc2_w"], np.float32)
    fc2b = np.zeros((1, 128), np.float32)
    fc2b[0, :64] = np.asarray(params["fc2_b"], np.float32)
    fc3w = np.zeros((1, 128), np.float32)
    fc3w[0, :64] = np.asarray(params["fc3_w"], np.float32)[:, 0]
    fc3b = np.asarray(params["fc3_b"], np.float32).reshape(1, 1)

    packed = {
        "w1": w1p, "b1": b1t, "w2": w2p, "b2": b2e,
        "fc1_w": fc1_wp, "fc1_b": fc1_b,
        "fc2_w": fc2p, "fc2_b": fc2b,
        "fc3_w": fc3w, "fc3_b": fc3b,
    }
    return {k: jnp.asarray(v) for k, v in packed.items()}


# ----------------------------------------------------------------------------- wrapper
def _resident(shape):
    n = len(shape)
    return pl.BlockSpec(shape, lambda i, _n=n: (0,) * _n)


def _vmem_limit_for(bt):
    # Generous per-sample estimate: double-buffered lane-padded input tile, conv1 GEMM
    # result + pool temps, pooled scratch + activation, fc intermediates; plus weights.
    per_sample = 4 * (6 * 64 * 128 + 4 * 1152 + 16 * 128)
    est = bt * per_sample + (4 << 20)
    if est <= (16 << 20):
        return None            # fits every generation's scoped-VMEM default
    return min(est, 56 << 20)  # stays below v7x's 64 MiB physical VMEM


def feature_v2_forward(x_ncdhw, packed, *, batch_tile=128, slope=NEG_SLOPE):
    """Fused forward of FeatureV2Model (eval mode). x: (B, 1, 8, 8, 8) f32 -> (B, 1).

    batch_tile guidance: v7x 128-256 (keep nb >= 2 to use both TensorCores),
    v6e 256-512, v5e 64-128.
    """
    assert batch_tile % 8 == 0
    B = x_ncdhw.shape[0]
    assert x_ncdhw.shape[1:] == (1, 8, 8, 8), x_ncdhw.shape

    # Host mini-im2col: (B,1,D,H,W) -> (B,H,W,D) -> (B, 64, 72); rows = h*8+w,
    # lanes = (kh*3+kw)*8 + d.  Out-of-range taps are zero (only read at discarded h/w>=6).
    x_s = jnp.transpose(x_ncdhw[:, 0], (0, 2, 3, 1)).astype(jnp.float32)   # (B, 8, 8, 8)
    taps = []
    for kh in range(3):
        for kw in range(3):
            taps.append(jnp.pad(x_s[:, kh:, kw:, :], ((0, 0), (0, kh), (0, kw), (0, 0))))
    x_prep = jnp.concatenate(taps, axis=-1).reshape(B, 64, 72)

    bt = min(batch_tile, _round_up(B, 8))
    Bp = _round_up(B, bt)
    if Bp != B:
        x_prep = jnp.pad(x_prep, ((0, Bp - B), (0, 0), (0, 0)))
    nb = Bp // bt

    flops = Bp * (2 * 64 * 72 * 128 + 2 * 1152 * 128 + 2 * 128 * 128 + 2 * 128 * 128 + 2 * 128)
    bytes_accessed = int(x_prep.size * 4 + sum(int(v.size) * 4 for v in packed.values()) + Bp * 4)

    out = pl.pallas_call(
        partial(_fused_kernel, slope=slope),
        out_shape=jax.ShapeDtypeStruct((nb, bt), jnp.float32),
        grid_spec=pltpu.PrefetchScalarGridSpec(
            num_scalar_prefetch=0,
            grid=(nb,),
            in_specs=[
                pl.BlockSpec((bt, 64, 72), lambda i: (i, 0, 0)),
                _resident((72, 128)),      # conv1 banded weight (K=72 GEMM)
                _resident((1, 1152)),      # conv1 bias, tiled per pooled 128-lane block
                _resident((1152, 128)),    # conv2 banded + flatten weight
                _resident((1, 128)),       # conv2 bias (tiled over dd)
                _resident((128, 128)),     # fc1 (row-permuted)
                _resident((1, 128)),
                _resident((128, 128)),     # fc2 (padded to 128 out lanes)
                _resident((1, 128)),
                _resident((1, 128)),       # fc3 row (padded to 128 lanes)
                _resident((1, 1)),
            ],
            out_specs=pl.BlockSpec((1, bt), lambda i: (i, 0)),   # lane-dense output row
            scratch_shapes=[pltpu.VMEM((bt, 1152), jnp.float32)],
        ),
        compiler_params=pltpu.CompilerParams(
            dimension_semantics=("parallel",),
            vmem_limit_bytes=_vmem_limit_for(bt)),
        cost_estimate=pl.CostEstimate(flops=flops, transcendentals=0,
                                      bytes_accessed=bytes_accessed),
    )(x_prep, packed["w1"], packed["b1"], packed["w2"], packed["b2"],
      packed["fc1_w"], packed["fc1_b"], packed["fc2_w"], packed["fc2_b"],
      packed["fc3_w"], packed["fc3_b"])
    return out.reshape(Bp, 1)[:B]


# ----------------------------------------------------------------------------- reference
def reference_forward(x, params, slope=NEG_SLOPE):
    """Pure-JAX (XLA) replica of the PyTorch forward, for verification."""
    def conv3d(y, w, b):
        dn = jax.lax.conv_dimension_numbers(y.shape, w.shape, ("NCDHW", "OIDHW", "NCDHW"))
        y = jax.lax.conv_general_dilated(y, w, (1, 1, 1), "VALID", dimension_numbers=dn)
        return y + b.reshape(1, -1, 1, 1, 1)

    lrelu = lambda t: jnp.where(t >= 0, t, slope * t)

    y = lrelu(conv3d(x, params["conv1_w"], params["conv1_b"]))
    y = jax.lax.reduce_window(y, -jnp.inf, jax.lax.max,
                              (1, 1, 1, 2, 2), (1, 1, 1, 2, 2), "VALID")
    y = lrelu(conv3d(y, params["conv2_w"], params["conv2_b"]))
    y = y.reshape(y.shape[0], -1)                                   # (B, 128)
    h = lrelu(y @ params["fc1_w"] + params["fc1_b"])
    h = lrelu(h @ params["fc2_w"] + params["fc2_b"])
    return h @ params["fc3_w"] + params["fc3_b"]


# ----------------------------------------------------------------------------- params
def init_params(key):
    ks = jax.random.split(key, 10)
    w = lambda k, shape, s: (s * jax.random.normal(k, shape)).astype(jnp.float32)
    return {
        # conv weights in PyTorch OIDHW layout
        "conv1_w": w(ks[0], (16, 1, 3, 3, 3), 0.20),
        "conv1_b": w(ks[1], (16,), 0.10),
        "conv2_w": w(ks[2], (32, 16, 3, 3, 3), 0.05),
        "conv2_b": w(ks[3], (32,), 0.10),
        # fc weights stored as (in, out)  [transpose a real nn.Linear checkpoint]
        "fc1_w": w(ks[4], (128, 128), 0.05),
        "fc1_b": w(ks[5], (128,), 0.05),
        "fc2_w": w(ks[6], (128, 64), 0.05),
        "fc2_b": w(ks[7], (64,), 0.05),
        "fc3_w": w(ks[8], (64, 1), 0.05),
        "fc3_b": w(ks[9], (1,), 0.05),
    }


if __name__ == "__main__":
    key = jax.random.PRNGKey(0)
    pkey, xkey, xkey2 = jax.random.split(key, 3)
    params = init_params(pkey)
    packed = pack_params(params)

    # args.signal_window_size = 8, args.data_preproc != 'gradient' -> in_channels = 1
    B = 2
    x = jax.random.normal(xkey, (B, 1, 8, 8, 8), dtype=jnp.float32)
    out = jax.block_until_ready(feature_v2_forward(x, packed))
    assert out.shape == (B, 1), out.shape
    ref = jax.block_until_ready(reference_forward(x, params))
    np.testing.assert_allclose(np.asarray(out), np.asarray(ref), rtol=2e-3, atol=2e-3)

    # Second check: exercises the multi-tile grid path, batch padding and the
    # lane-dense (nb, bt) output layout.
    B2 = 40
    x2 = jax.random.normal(xkey2, (B2, 1, 8, 8, 8), dtype=jnp.float32)
    out2 = jax.block_until_ready(feature_v2_forward(x2, packed, batch_tile=16))
    assert out2.shape == (B2, 1), out2.shape
    ref2 = jax.block_until_ready(reference_forward(x2, params))
    np.testing.assert_allclose(np.asarray(out2), np.asarray(ref2), rtol=2e-3, atol=2e-3)

    print("KERNEL_OK")
</pallas_src>

<mosaic_0001>
module attributes {stable_mosaic.version = 11 : i64} {
  func.func @_fused_kernel(%arg0: i32, %arg1: memref<8x64x72xf32, #tpu.memory_space<vmem>>, %arg2: memref<72x128xf32, #tpu.memory_space<vmem>>, %arg3: memref<1x1152xf32, #tpu.memory_space<vmem>>, %arg4: memref<1152x128xf32, #tpu.memory_space<vmem>>, %arg5: memref<1x128xf32, #tpu.memory_space<vmem>>, %arg6: memref<128x128xf32, #tpu.memory_space<vmem>>, %arg7: memref<1x128xf32, #tpu.memory_space<vmem>>, %arg8: memref<128x128xf32, #tpu.memory_space<vmem>>, %arg9: memref<1x128xf32, #tpu.memory_space<vmem>>, %arg10: memref<1x128xf32, #tpu.memory_space<vmem>>, %arg11: memref<1x1xf32, #tpu.memory_space<vmem>>, %arg12: memref<1x8xf32, #tpu.memory_space<vmem>>, %arg13: memref<8x1152xf32, #tpu.memory_space<vmem>>) attributes {dimension_semantics = [#tpu.dimension_semantics<parallel>], iteration_bounds = array<i64: 1>, scalar_prefetch = 0 : i64, scratch_operands = 1 : i64, tpu.core_type = #tpu.core_type<tc>, window_params = [{transform_indices = @transform_0, window_bounds = array<i64: 8, 64, 72>}, {pipeline_mode = #tpu.pipeline_mode<synchronous>, transform_indices = @transform_1, window_bounds = array<i64: 72, 128>}, {pipeline_mode = #tpu.pipeline_mode<synchronous>, transform_indices = @transform_2, window_bounds = array<i64: 1, 1152>}, {pipeline_mode = #tpu.pipeline_mode<synchronous>, transform_indices = @transform_3, window_bounds = array<i64: 1152, 128>}, {pipeline_mode = #tpu.pipeline_mode<synchronous>, transform_indices = @transform_4, window_bounds = array<i64: 1, 128>}, {pipeline_mode = #tpu.pipeline_mode<synchronous>, transform_indices = @transform_5, window_bounds = array<i64: 128, 128>}, {pipeline_mode = #tpu.pipeline_mode<synchronous>, transform_indices = @transform_6, window_bounds = array<i64: 1, 128>}, {pipeline_mode = #tpu.pipeline_mode<synchronous>, transform_indices = @transform_7, window_bounds = array<i64: 128, 128>}, {pipeline_mode = #tpu.pipeline_mode<synchronous>, transform_indices = @transform_8, window_bounds = array<i64: 1, 128>}, {pipeline_mode = #tpu.pipeline_mode<synchronous>, transform_indices = @transform_9, window_bounds = array<i64: 1, 128>}, {pipeline_mode = #tpu.pipeline_mode<synchronous>, transform_indices = @transform_10, window_bounds = array<i64: 1, 1>}, {transform_indices = @transform_11, window_bounds = array<i64: 1, 8>}]} {
    %c0 = arith.constant 0 : index
    %c0_0 = arith.constant 0 : index
    %c0_1 = arith.constant 0 : index
    %0 = vector.load %arg1[%c0, %c0_0, %c0_1] : memref<8x64x72xf32, #tpu.memory_space<vmem>>, vector<8x64x72xf32>
    %1 = vector.shape_cast %0 : vector<8x64x72xf32> to vector<512x72xf32>
    %c0_2 = arith.constant 0 : index
    %c0_3 = arith.constant 0 : index
    %2 = vector.load %arg2[%c0_2, %c0_3] : memref<72x128xf32, #tpu.memory_space<vmem>>, vector<72x128xf32>
    %cst = arith.constant dense<0.000000e+00> : vector<512x128xf32>
    %3 = tpu.matmul %1, %2, %cst {dimension_numbers = #tpu.dot_dimension_numbers<[1], [0], [0], [1], [0, 0, 1, 1], [], []>} : vector<512x72xf32>, vector<72x128xf32>, vector<512x128xf32> -> vector<512x128xf32>
    %4 = vector.shape_cast %3 : vector<512x128xf32> to vector<8x8x8x128xf32>
    %5 = vector.extract_strided_slice %4 {offsets = [0, 0, 0, 0], sizes = [8, 1, 8, 128], strides = [1, 1, 1, 1]} : vector<8x8x8x128xf32> to vector<8x1x8x128xf32>
    %6 = vector.shape_cast %5 : vector<8x1x8x128xf32> to vector<8x8x128xf32>
    %7 = vector.extract_strided_slice %4 {offsets = [0, 1, 0, 0], sizes = [8, 1, 8, 128], strides = [1, 1, 1, 1]} : vector<8x8x8x128xf32> to vector<8x1x8x128xf32>
    %8 = vector.shape_cast %7 : vector<8x1x8x128xf32> to vector<8x8x128xf32>
    %9 = arith.maximumf %6, %8 : vector<8x8x128xf32>
    %10 = vector.extract_strided_slice %9 {offsets = [0, 0, 0], sizes = [8, 1, 128], strides = [1, 1, 1]} : vector<8x8x128xf32> to vector<8x1x128xf32>
    %11 = vector.shape_cast %10 : vector<8x1x128xf32> to vector<8x128xf32>
    %12 = vector.extract_strided_slice %9 {offsets = [0, 1, 0], sizes = [8, 1, 128], strides = [1, 1, 1]} : vector<8x8x128xf32> to vector<8x1x128xf32>
    %13 = vector.shape_cast %12 : vector<8x1x128xf32> to vector<8x128xf32>
    %14 = arith.maximumf %11, %13 : vector<8x128xf32>
    %c0_4 = arith.constant 0 : index
    %c0_5 = arith.constant 0 : index
    %15 = vector.load %arg13[%c0_4, %c0_5] : memref<8x1152xf32, #tpu.memory_space<vmem>>, vector<8x128xf32>
    tpu.vector_store %arg13[%c0_4, %c0_5], %14 {strides = array<i32>} : memref<8x1152xf32, #tpu.memory_space<vmem>>, vector<8x128xf32>,
    %16 = vector.extract_strided_slice %9 {offsets = [0, 2, 0], sizes = [8, 1, 128], strides = [1, 1, 1]} : vector<8x8x128xf32> to vector<8x1x128xf32>
    %17 = vector.shape_cast %16 : vector<8x1x128xf32> to vector<8x128xf32>
    %18 = vector.extract_strided_slice %9 {offsets = [0, 3, 0], sizes = [8, 1, 128], strides = [1, 1, 1]} : vector<8x8x128xf32> to vector<8x1x128xf32>
    %19 = vector.shape_cast %18 : vector<8x1x128xf32> to vector<8x128xf32>
    %20 = arith.maximumf %17, %19 : vector<8x128xf32>
    %c0_6 = arith.constant 0 : index
    %c128 = arith.constant 128 : index
    %21 = vector.load %arg13[%c0_6, %c128] : memref<8x1152xf32, #tpu.memory_space<vmem>>, vector<8x128xf32>
    tpu.vector_store %arg13[%c0_6, %c128], %20 {strides = array<i32>} : memref<8x1152xf32, #tpu.memory_space<vmem>>, vector<8x128xf32>,
    %22 = vector.extract_strided_slice %9 {offsets = [0, 4, 0], sizes = [8, 1, 128], strides = [1, 1, 1]} : vector<8x8x128xf32> to vector<8x1x128xf32>
    %23 = vector.shape_cast %22 : vector<8x1x128xf32> to vector<8x128xf32>
    %24 = vector.extract_strided_slice %9 {offsets = [0, 5, 0], sizes = [8, 1, 128], strides = [1, 1, 1]} : vector<8x8x128xf32> to vector<8x1x128xf32>
    %25 = vector.shape_cast %24 : vector<8x1x128xf32> to vector<8x128xf32>
    %26 = arith.maximumf %23, %25 : vector<8x128xf32>
    %c0_7 = arith.constant 0 : index
    %c256 = arith.constant 256 : index
    %27 = vector.load %arg13[%c0_7, %c256] : memref<8x1152xf32, #tpu.memory_space<vmem>>, vector<8x128xf32>
    tpu.vector_store %arg13[%c0_7, %c256], %26 {strides = array<i32>} : memref<8x1152xf32, #tpu.memory_space<vmem>>, vector<8x128xf32>,
    %28 = vector.extract_strided_slice %4 {offsets = [0, 2, 0, 0], sizes = [8, 1, 8, 128], strides = [1, 1, 1, 1]} : vector<8x8x8x128xf32> to vector<8x1x8x128xf32>
    %29 = vector.shape_cast %28 : vector<8x1x8x128xf32> to vector<8x8x128xf32>
    %30 = vector.extract_strided_slice %4 {offsets = [0, 3, 0, 0], sizes = [8, 1, 8, 128], strides = [1, 1, 1, 1]} : vector<8x8x8x128xf32> to vector<8x1x8x128xf32>
    %31 = vector.shape_cast %30 : vector<8x1x8x128xf32> to vector<8x8x128xf32>
    %32 = arith.maximumf %29, %31 : vector<8x8x128xf32>
    %33 = vector.extract_strided_slice %32 {offsets = [0, 0, 0], sizes = [8, 1, 128], strides = [1, 1, 1]} : vector<8x8x128xf32> to vector<8x1x128xf32>
    %34 = vector.shape_cast %33 : vector<8x1x128xf32> to vector<8x128xf32>
    %35 = vector.extract_strided_slice %32 {offsets = [0, 1, 0], sizes = [8, 1, 128], strides = [1, 1, 1]} : vector<8x8x128xf32> to vector<8x1x128xf32>
    %36 = vector.shape_cast %35 : vector<8x1x128xf32> to vector<8x128xf32>
    %37 = arith.maximumf %34, %36 : vector<8x128xf32>
    %c0_8 = arith.constant 0 : index
    %c384 = arith.constant 384 : index
    %38 = vector.load %arg13[%c0_8, %c384] : memref<8x1152xf32, #tpu.memory_space<vmem>>, vector<8x128xf32>
    tpu.vector_store %arg13[%c0_8, %c384], %37 {strides = array<i32>} : memref<8x1152xf32, #tpu.memory_space<vmem>>, vector<8x128xf32>,
    %39 = vector.extract_strided_slice %32 {offsets = [0, 2, 0], sizes = [8, 1, 128], strides = [1, 1, 1]} : vector<8x8x128xf32> to vector<8x1x128xf32>
    %40 = vector.shape_cast %39 : vector<8x1x128xf32> to vector<8x128xf32>
    %41 = vector.extract_strided_slice %32 {offsets = [0, 3, 0], sizes = [8, 1, 128], strides = [1, 1, 1]} : vector<8x8x128xf32> to vector<8x1x128xf32>
    %42 = vector.shape_cast %41 : vector<8x1x128xf32> to vector<8x128xf32>
    %43 = arith.maximumf %40, %42 : vector<8x128xf32>
    %c0_9 = arith.constant 0 : index
    %c512 = arith.constant 512 : index
    %44 = vector.load %arg13[%c0_9, %c512] : memref<8x1152xf32, #tpu.memory_space<vmem>>, vector<8x128xf32>
    tpu.vector_store %arg13[%c0_9, %c512], %43 {strides = array<i32>} : memref<8x1152xf32, #tpu.memory_space<vmem>>, vector<8x128xf32>,
    %45 = vector.extract_strided_slice %32 {offsets = [0, 4, 0], sizes = [8, 1, 128], strides = [1, 1, 1]} : vector<8x8x128xf32> to vector<8x1x128xf32>
    %46 = vector.shape_cast %45 : vector<8x1x128xf32> to vector<8x128xf32>
    %47 = vector.extract_strided_slice %32 {offsets = [0, 5, 0], sizes = [8, 1, 128], strides = [1, 1, 1]} : vector<8x8x128xf32> to vector<8x1x128xf32>
    %48 = vector.shape_cast %47 : vector<8x1x128xf32> to vector<8x128xf32>
    %49 = arith.maximumf %46, %48 : vector<8x128xf32>
    %c0_10 = arith.constant 0 : index
    %c640 = arith.constant 640 : index
    %50 = vector.load %arg13[%c0_10, %c640] : memref<8x1152xf32, #tpu.memory_space<vmem>>, vector<8x128xf32>
    tpu.vector_store %arg13[%c0_10, %c640], %49 {strides = array<i32>} : memref<8x1152xf32, #tpu.memory_space<vmem>>, vector<8x128xf32>,
    %51 = vector.extract_strided_slice %4 {offsets = [0, 4, 0, 0], sizes = [8, 1, 8, 128], strides = [1, 1, 1, 1]} : vector<8x8x8x128xf32> to vector<8x1x8x128xf32>
    %52 = vector.shape_cast %51 : vector<8x1x8x128xf32> to vector<8x8x128xf32>
    %53 = vector.extract_strided_slice %4 {offsets = [0, 5, 0, 0], sizes = [8, 1, 8, 128], strides = [1, 1, 1, 1]} : vector<8x8x8x128xf32> to vector<8x1x8x128xf32>
    %54 = vector.shape_cast %53 : vector<8x1x8x128xf32> to vector<8x8x128xf32>
    %55 = arith.maximumf %52, %54 : vector<8x8x128xf32>
    %56 = vector.extract_strided_slice %55 {offsets = [0, 0, 0], sizes = [8, 1, 128], strides = [1, 1, 1]} : vector<8x8x128xf32> to vector<8x1x128xf32>
    %57 = vector.shape_cast %56 : vector<8x1x128xf32> to vector<8x128xf32>
    %58 = vector.extract_strided_slice %55 {offsets = [0, 1, 0], sizes = [8, 1, 128], strides = [1, 1, 1]} : vector<8x8x128xf32> to vector<8x1x128xf32>
    %59 = vector.shape_cast %58 : vector<8x1x128xf32> to vector<8x128xf32>
    %60 = arith.maximumf %57, %59 : vector<8x128xf32>
    %c0_11 = arith.constant 0 : index
    %c768 = arith.constant 768 : index
    %61 = vector.load %arg13[%c0_11, %c768] : memref<8x1152xf32, #tpu.memory_space<vmem>>, vector<8x128xf32>
    tpu.vector_store %arg13[%c0_11, %c768], %60 {strides = array<i32>} : memref<8x1152xf32, #tpu.memory_space<vmem>>, vector<8x128xf32>,
    %62 = vector.extract_strided_slice %55 {offsets = [0, 2, 0], sizes = [8, 1, 128], strides = [1, 1, 1]} : vector<8x8x128xf32> to vector<8x1x128xf32>
    %63 = vector.shape_cast %62 : vector<8x1x128xf32> to vector<8x128xf32>
    %64 = vector.extract_strided_slice %55 {offsets = [0, 3, 0], sizes = [8, 1, 128], strides = [1, 1, 1]} : vector<8x8x128xf32> to vector<8x1x128xf32>
    %65 = vector.shape_cast %64 : vector<8x1x128xf32> to vector<8x128xf32>
    %66 = arith.maximumf %63, %65 : vector<8x128xf32>
    %c0_12 = arith.constant 0 : index
    %c896 = arith.constant 896 : index
    %67 = vector.load %arg13[%c0_12, %c896] : memref<8x1152xf32, #tpu.memory_space<vmem>>, vector<8x128xf32>
    tpu.vector_store %arg13[%c0_12, %c896], %66 {strides = array<i32>} : memref<8x1152xf32, #tpu.memory_space<vmem>>, vector<8x128xf32>,
    %68 = vector.extract_strided_slice %55 {offsets = [0, 4, 0], sizes = [8, 1, 128], strides = [1, 1, 1]} : vector<8x8x128xf32> to vector<8x1x128xf32>
    %69 = vector.shape_cast %68 : vector<8x1x128xf32> to vector<8x128xf32>
    %70 = vector.extract_strided_slice %55 {offsets = [0, 5, 0], sizes = [8, 1, 128], strides = [1, 1, 1]} : vector<8x8x128xf32> to vector<8x1x128xf32>
    %71 = vector.shape_cast %70 : vector<8x1x128xf32> to vector<8x128xf32>
    %72 = arith.maximumf %69, %71 : vector<8x128xf32>
    %c0_13 = arith.constant 0 : index
    %c1024 = arith.constant 1024 : index
    %73 = vector.load %arg13[%c0_13, %c1024] : memref<8x1152xf32, #tpu.memory_space<vmem>>, vector<8x128xf32>
    tpu.vector_store %arg13[%c0_13, %c1024], %72 {strides = array<i32>} : memref<8x1152xf32, #tpu.memory_space<vmem>>, vector<8x128xf32>,
    %c0_14 = arith.constant 0 : index
    %c0_15 = arith.constant 0 : index
    %74 = vector.load %arg13[%c0_14, %c0_15] : memref<8x1152xf32, #tpu.memory_space<vmem>>, vector<8x1152xf32>
    %c0_16 = arith.constant 0 : index
    %c0_17 = arith.constant 0 : index
    %75 = vector.load %arg3[%c0_16, %c0_17] : memref<1x1152xf32, #tpu.memory_space<vmem>>, vector<1x1152xf32>
    %76 = vector.broadcast %75 : vector<1x1152xf32> to vector<8x1152xf32>
    %77 = arith.addf %74, %76 : vector<8x1152xf32>
    %cst_18 = arith.constant 0.000000e+00 : f32
    %78 = vector.broadcast %cst_18 : f32 to vector<8x1152xf32>
    %79 = arith.cmpf oge, %77, %78 : vector<8x1152xf32>
    %cst_19 = arith.constant 2.000000e-02 : f32
    %80 = vector.broadcast %cst_19 : f32 to vector<8x1152xf32>
    %81 = arith.mulf %80, %77 : vector<8x1152xf32>
    %82 = arith.select %79, %77, %81 : vector<8x1152xi1>, vector<8x1152xf32>
    %c0_20 = arith.constant 0 : index
    %c0_21 = arith.constant 0 : index
    %83 = vector.load %arg4[%c0_20, %c0_21] : memref<1152x128xf32, #tpu.memory_space<vmem>>, vector<1152x128xf32>
    %cst_22 = arith.constant dense<0.000000e+00> : vector<8x128xf32>
    %84 = tpu.matmul %82, %83, %cst_22 {dimension_numbers = #tpu.dot_dimension_numbers<[1], [0], [0], [1], [0, 0, 1, 1], [], []>} : vector<8x1152xf32>, vector<1152x128xf32>, vector<8x128xf32> -> vector<8x128xf32>
    %c0_23 = arith.constant 0 : index
    %c0_24 = arith.constant 0 : index
    %85 = vector.load %arg5[%c0_23, %c0_24] : memref<1x128xf32, #tpu.memory_space<vmem>>, vector<1x128xf32>
    %86 = vector.broadcast %85 : vector<1x128xf32> to vector<8x128xf32>
    %87 = arith.addf %84, %86 : vector<8x128xf32>
    %cst_25 = arith.constant 0.000000e+00 : f32
    %88 = vector.broadcast %cst_25 : f32 to vector<8x128xf32>
    %89 = arith.cmpf oge, %87, %88 : vector<8x128xf32>
    %cst_26 = arith.constant 2.000000e-02 : f32
    %90 = vector.broadcast %cst_26 : f32 to vector<8x128xf32>
    %91 = arith.mulf %90, %87 : vector<8x128xf32>
    %92 = arith.select %89, %87, %91 : vector<8x128xi1>, vector<8x128xf32>
    %c0_27 = arith.constant 0 : index
    %c0_28 = arith.constant 0 : index
    %93 = vector.load %arg6[%c0_27, %c0_28] : memref<128x128xf32, #tpu.memory_space<vmem>>, vector<128x128xf32>
    %cst_29 = arith.constant dense<0.000000e+00> : vector<8x128xf32>
    %94 = tpu.matmul %92, %93, %cst_29 {dimension_numbers = #tpu.dot_dimension_numbers<[1], [0], [0], [1], [0, 0, 1, 1], [], []>} : vector<8x128xf32>, vector<128x128xf32>, vector<8x128xf32> -> vector<8x128xf32>
    %c0_30 = arith.constant 0 : index
    %c0_31 = arith.constant 0 : index
    %95 = vector.load %arg7[%c0_30, %c0_31] : memref<1x128xf32, #tpu.memory_space<vmem>>, vector<1x128xf32>
    %96 = vector.broadcast %95 : vector<1x128xf32> to vector<8x128xf32>
    %97 = arith.addf %94, %96 : vector<8x128xf32>
    %cst_32 = arith.constant 0.000000e+00 : f32
    %98 = vector.broadcast %cst_32 : f32 to vector<8x128xf32>
    %99 = arith.cmpf oge, %97, %98 : vector<8x128xf32>
    %cst_33 = arith.constant 2.000000e-02 : f32
    %100 = vector.broadcast %cst_33 : f32 to vector<8x128xf32>
    %101 = arith.mulf %100, %97 : vector<8x128xf32>
    %102 = arith.select %99, %97, %101 : vector<8x128xi1>, vector<8x128xf32>
    %c0_34 = arith.constant 0 : index
    %c0_35 = arith.constant 0 : index
    %103 = vector.load %arg8[%c0_34, %c0_35] : memref<128x128xf32, #tpu.memory_space<vmem>>, vector<128x128xf32>
    %cst_36 = arith.constant dense<0.000000e+00> : vector<8x128xf32>
    %104 = tpu.matmul %102, %103, %cst_36 {dimension_numbers = #tpu.dot_dimension_numbers<[1], [0], [0], [1], [0, 0, 1, 1], [], []>} : vector<8x128xf32>, vector<128x128xf32>, vector<8x128xf32> -> vector<8x128xf32>
    %c0_37 = arith.constant 0 : index
    %c0_38 = arith.constant 0 : index
    %105 = vector.load %arg9[%c0_37, %c0_38] : memref<1x128xf32, #tpu.memory_space<vmem>>, vector<1x128xf32>
    %106 = vector.broadcast %105 : vector<1x128xf32> to vector<8x128xf32>
    %107 = arith.addf %104, %106 : vector<8x128xf32>
    %cst_39 = arith.constant 0.000000e+00 : f32
    %108 = vector.broadcast %cst_39 : f32 to vector<8x128xf32>
    %109 = arith.cmpf oge, %107, %108 : vector<8x128xf32>
    %cst_40 = arith.constant 2.000000e-02 : f32
    %110 = vector.broadcast %cst_40 : f32 to vector<8x128xf32>
    %111 = arith.mulf %110, %107 : vector<8x128xf32>
    %112 = arith.select %109, %107, %111 : vector<8x128xi1>, vector<8x128xf32>
    %c0_41 = arith.constant 0 : index
    %c0_42 = arith.constant 0 : index
    %113 = vector.load %arg10[%c0_41, %c0_42] : memref<1x128xf32, #tpu.memory_space<vmem>>, vector<1x128xf32>
    %114 = tpu.transpose %112, [1, 0] : vector<8x128xf32> -> vector<128x8xf32>
    %cst_43 = arith.constant dense<0.000000e+00> : vector<1x8xf32>
    %115 = tpu.matmul %113, %114, %cst_43 {dimension_numbers = #tpu.dot_dimension_numbers<[1], [0], [0], [1], [0, 0, 1, 1], [], []>} : vector<1x128xf32>, vector<128x8xf32>, vector<1x8xf32> -> vector<1x8xf32>
    %c0_44 = arith.constant 0 : index
    %c0_45 = arith.constant 0 : index
    %116 = vector.load %arg11[%c0_44, %c0_45] : memref<1x1xf32, #tpu.memory_space<vmem>>, vector<1x1xf32>
    %117 = vector.broadcast %116 : vector<1x1xf32> to vector<1x8xf32>
    %118 = arith.addf %115, %117 : vector<1x8xf32>
    %c0_46 = arith.constant 0 : index
    %c0_47 = arith.constant 0 : index
    %119 = vector.load %arg12[%c0_46, %c0_47] : memref<1x8xf32, #tpu.memory_space<vmem>>, vector<1x8xf32>
    tpu.vector_store %arg12[%c0_46, %c0_47], %118 {strides = array<i32>} : memref<1x8xf32, #tpu.memory_space<vmem>>, vector<1x8xf32>,
    return
  }
  func.func @transform_0(%arg0: i32) -> (i32, i32, i32) {
    %c0_i32 = arith.constant 0 : i32
    %c0_i32_0 = arith.constant 0 : i32
    %c0_i32_1 = arith.constant 0 : i32
    return %arg0, %c0_i32, %c0_i32_0 : i32, i32, i32
  }
  func.func @transform_1(%arg0: i32) -> (i32, i32) {
    %c0_i32 = arith.constant 0 : i32
    %c0_i32_0 = arith.constant 0 : i32
    %c0_i32_1 = arith.constant 0 : i32
    return %c0_i32, %c0_i32_0 : i32, i32
  }
  func.func @transform_2(%arg0: i32) -> (i32, i32) {
    %c0_i32 = arith.constant 0 : i32
    %c0_i32_0 = arith.constant 0 : i32
    %c0_i32_1 = arith.constant 0 : i32
    return %c0_i32, %c0_i32_0 : i32, i32
  }
  func.func @transform_3(%arg0: i32) -> (i32, i32) {
    %c0_i32 = arith.constant 0 : i32
    %c0_i32_0 = arith.constant 0 : i32
    %c0_i32_1 = arith.constant 0 : i32
    return %c0_i32, %c0_i32_0 : i32, i32
  }
  func.func @transform_4(%arg0: i32) -> (i32, i32) {
    %c0_i32 = arith.constant 0 : i32
    %c0_i32_0 = arith.constant 0 : i32
    %c0_i32_1 = arith.constant 0 : i32
    return %c0_i32, %c0_i32_0 : i32, i32
  }
  func.func @transform_5(%arg0: i32) -> (i32, i32) {
    %c0_i32 = arith.constant 0 : i32
    %c0_i32_0 = arith.constant 0 : i32
    %c0_i32_1 = arith.constant 0 : i32
    return %c0_i32, %c0_i32_0 : i32, i32
  }
  func.func @transform_6(%arg0: i32) -> (i32, i32) {
    %c0_i32 = arith.constant 0 : i32
    %c0_i32_0 = arith.constant 0 : i32
    %c0_i32_1 = arith.constant 0 : i32
    return %c0_i32, %c0_i32_0 : i32, i32
  }
  func.func @transform_7(%arg0: i32) -> (i32, i32) {
    %c0_i32 = arith.constant 0 : i32
    %c0_i32_0 = arith.constant 0 : i32
    %c0_i32_1 = arith.constant 0 : i32
    return %c0_i32, %c0_i32_0 : i32, i32
  }
  func.func @transform_8(%arg0: i32) -> (i32, i32) {
    %c0_i32 = arith.constant 0 : i32
    %c0_i32_0 = arith.constant 0 : i32
    %c0_i32_1 = arith.constant 0 : i32
    return %c0_i32, %c0_i32_0 : i32, i32
  }
  func.func @transform_9(%arg0: i32) -> (i32, i32) {
    %c0_i32 = arith.constant 0 : i32
    %c0_i32_0 = arith.constant 0 : i32
    %c0_i32_1 = arith.constant 0 : i32
    return %c0_i32, %c0_i32_0 : i32, i32
  }
  func.func @transform_10(%arg0: i32) -> (i32, i32) {
    %c0_i32 = arith.constant 0 : i32
    %c0_i32_0 = arith.constant 0 : i32
    %c0_i32_1 = arith.constant 0 : i32
    return %c0_i32, %c0_i32_0 : i32, i32
  }
  func.func @transform_11(%arg0: i32) -> (i32, i32) {
    %c0_i32 = arith.constant 0 : i32
    %c0_i32_0 = arith.constant 0 : i32
    return %arg0, %c0_i32 : i32, i32
  }
}

</mosaic_0001>

<llo_original>
// kernel: tpu_custom_call.1
$region0: #{tpu_custom_call.1}
  #allocation0 [shape = 'u32[]', space=smem, size = 0x4, offset = 0x4, fixed_abs, tag = 'smem constant byte address 0x4 - core index']
  #allocation1 [shape = 'u32[72,128]{1,0:T(1,128)}', space=vmem, size = 0x9000, scoped, tag = 'internal scratch']
  #allocation2 [shape = 'f32[8,1152]{1,0:T(8,128)}', space=vmem, size = 0x9000, scoped, tag = 'scratch operand']
  #allocation3 [shape = 'f32[1,1]{1,0:T(1,128)S(1)}', space=vmem, size = 0x200, scoped, tag = 'scoped memory for tpu_custom_call.1']
  %s0 = inlined_call_operand.hbm [shape: f32[8,64,72], index: 0, kind: input, shape index: {}]
  %s1 = inlined_call_operand.hbm [shape: f32[72,128], index: 1, kind: input, shape index: {}]
  %s2 = inlined_call_operand.hbm [shape: f32[1,1152], index: 2, kind: input, shape index: {}]
  %s3 = inlined_call_operand.hbm [shape: f32[1152,128], index: 3, kind: input, shape index: {}]
  %s4 = inlined_call_operand.vmem [shape: f32[1,128], index: 4, kind: input, shape index: {}]
  %s5 = inlined_call_operand.hbm [shape: f32[128,128], index: 5, kind: input, shape index: {}]
  %s6 = inlined_call_operand.vmem [shape: f32[1,128], index: 6, kind: input, shape index: {}]
  %s7 = inlined_call_operand.hbm [shape: f32[128,128], index: 7, kind: input, shape index: {}]
  %s8 = inlined_call_operand.vmem [shape: f32[1,128], index: 8, kind: input, shape index: {}]
  %s9 = inlined_call_operand.vmem [shape: f32[1,128], index: 9, kind: input, shape index: {}]
  %s10 = inlined_call_operand.<no memory space> [shape: f32[1,1], index: 10, kind: input, shape index: {}]
  %s11 = inlined_call_operand.hbm [shape: f32[1,8], index: 11, kind: output, shape index: {}]
  %s12 = sld [smem:[#allocation0]]
  $region78: #{tpu_custom_call.1} parent=0
    _
  %s14 = ssub.s32 1, %s12
  %s15 = scalar_select 0, %s14, %s12
  %v16 = vstv %s10
  %17 = vst [vmem:[#allocation3] sm:$0x1] %v16
  $region1: #{tpu_custom_call.1} parent=0
    #allocation4 [shape = 'u8[262144]{0}', space=vmem, size = 0x40000, scoped, tag = 'input window, operand 0, single buffered']
    #allocation5 [shape = 's32[1]{0}', space=sflag, size = 0x4, scoped, tag = 'scoped memory for tpu_custom_call.1']
    #allocation6 [shape = 's32[1]{0}', space=sflag, size = 0x4, scoped, tag = 'scoped memory for tpu_custom_call.1']
    #allocation7 [shape = 'u8[36864]{0}', space=vmem, size = 0x9000, scoped, tag = 'input window, operand 1, single buffered']
    #allocation8 [shape = 's32[1]{0}', space=sflag, size = 0x4, scoped, tag = 'scoped memory for tpu_custom_call.1']
    #allocation9 [shape = 'u8[4608]{0}', space=vmem, size = 0x1400, scoped, tag = 'input window, operand 2, single buffered']
    #allocation10 [shape = 'u8[589824]{0}', space=vmem, size = 0x90000, scoped, tag = 'input window, operand 3, single buffered']
    #allocation11 [shape = 's32[1]{0}', space=sflag, size = 0x4, scoped, tag = 'scoped memory for tpu_custom_call.1']
    #allocation12 [shape = 'u8[65536]{0}', space=vmem, size = 0x10000, scoped, tag = 'input window, operand 5, single buffered']
    #allocation13 [shape = 'u8[65536]{0}', space=vmem, size = 0x10000, scoped, tag = 'input window, operand 7, single buffered']
    #allocation14 [shape = 's32[1]{0}', space=sflag, size = 0x4, scoped, tag = 'scoped memory for tpu_custom_call.1']
    #allocation15 [shape = 'u8[512]{0}', space=vmem, size = 0x400, scoped, tag = 'output window, operand 0, single buffered']
    %18 = vsyncpa [#allocation5], 0
    %19 = vsyncpa [#allocation8], 0
    %20 = vsyncpa [#allocation11], 0
    %21 = vsyncpa [#allocation14], 0
    %22 = vsyncpa [#allocation6], 0
    // Predicated region
    $region2: #{tpu_custom_call.1} parent=1 // pred_check
      _
    $region3: #{tpu_custom_call.1} parent=1 // pred_check_branch
      %24 = sbr.rel (0) target = $region5
    $region4: #{tpu_custom_call.1} parent=1 // pred_region
      %26 = vsyncadd [#allocation5], 0
      %s27 = sshll.u32 %s0, 4
      %s28 = int_to_ptr.hbm [resolvable:$true] %s27
      %s29 = sshll.u32 [#allocation4], 4
      %s30 = int_to_ptr.vmem [resolvable:$true] %s29
      %35 = dma.hbm_to_vmem [thread:$0]  %s28, 8192, %s30, [#allocation5], 128, 128, 8
    $region5: #{tpu_custom_call.1} parent=1 // pred_fallthru
      _
    // Predicated region
    $region6: #{tpu_custom_call.1} parent=1 // pred_check
      _
    $region7: #{tpu_custom_call.1} parent=1 // pred_check_branch
      %37 = sbr.rel (0) target = $region9
    $region8: #{tpu_custom_call.1} parent=1 // pred_region
      %39 = vsyncadd [#allocation8], 0
      %s40 = sshll.u32 %s1, 4
      %s41 = int_to_ptr.hbm [resolvable:$true] %s40
      %s42 = sshll.u32 [#allocation7], 4
      %s43 = int_to_ptr.vmem [resolvable:$true] %s42
      %48 = dma.hbm_to_vmem [thread:$0]  %s41, 1152, %s43, [#allocation8], 128, 128, 8
    $region9: #{tpu_custom_call.1} parent=1 // pred_fallthru
      _
    // Predicated region
    $region10: #{tpu_custom_call.1} parent=1 // pred_check
      _
    $region11: #{tpu_custom_call.1} parent=1 // pred_check_branch
      %50 = sbr.rel (0) target = $region13
    $region12: #{tpu_custom_call.1} parent=1 // pred_region
      %52 = vsyncadd [#allocation8], 0
      %s54 = sshll.u32 %s2, 4
      %s55 = int_to_ptr.hbm [resolvable:$true] %s54
      %s56 = sshll.u32 [#allocation9], 4
      %s57 = int_to_ptr.vmem [resolvable:$true] %s56
      %59 = dma.hbm_to_vmem [thread:$0]  %s55, 144, %s57, [#allocation8]
    $region13: #{tpu_custom_call.1} parent=1 // pred_fallthru
      _
    // Predicated region
    $region14: #{tpu_custom_call.1} parent=1 // pred_check
      _
    $region15: #{tpu_custom_call.1} parent=1 // pred_check_branch
      %61 = sbr.rel (0) target = $region17
    $region16: #{tpu_custom_call.1} parent=1 // pred_region
      %63 = vsyncadd [#allocation11], 0
      %s64 = sshll.u32 %s3, 4
      %s65 = int_to_ptr.hbm [resolvable:$true] %s64
      %s66 = sshll.u32 [#allocation10], 4
      %s67 = int_to_ptr.vmem [resolvable:$true] %s66
      %72 = dma.hbm_to_vmem [thread:$0]  %s65, 18432, %s67, [#allocation11], 128, 128, 8
    $region17: #{tpu_custom_call.1} parent=1 // pred_fallthru
      _
    // Predicated region
    $region18: #{tpu_custom_call.1} parent=1 // pred_check
      _
    $region19: #{tpu_custom_call.1} parent=1 // pred_check_branch
      %74 = sbr.rel (0) target = $region21
    $region20: #{tpu_custom_call.1} parent=1 // pred_region
      _
    $region21: #{tpu_custom_call.1} parent=1 // pred_fallthru
      _
    // Predicated region
    $region22: #{tpu_custom_call.1} parent=1 // pred_check
      _
    $region23: #{tpu_custom_call.1} parent=1 // pred_check_branch
      %76 = sbr.rel (0) target = $region25
    $region24: #{tpu_custom_call.1} parent=1 // pred_region
      %78 = vsyncadd [#allocation11], 0
      %s79 = sshll.u32 %s5, 4
      %s80 = int_to_ptr.hbm [resolvable:$true] %s79
      %s81 = sshll.u32 [#allocation12], 4
      %s82 = int_to_ptr.vmem [resolvable:$true] %s81
      %87 = dma.hbm_to_vmem [thread:$0]  %s80, 2048, %s82, [#allocation11], 128, 128, 8
    $region25: #{tpu_custom_call.1} parent=1 // pred_fallthru
      _
    // Predicated region
    $region26: #{tpu_custom_call.1} parent=1 // pred_check
      _
    $region27: #{tpu_custom_call.1} parent=1 // pred_check_branch
      %89 = sbr.rel (0) target = $region29
    $region28: #{tpu_custom_call.1} parent=1 // pred_region
      _
    $region29: #{tpu_custom_call.1} parent=1 // pred_fallthru
      _
    // Predicated region
    $region30: #{tpu_custom_call.1} parent=1 // pred_check
      _
    $region31: #{tpu_custom_call.1} parent=1 // pred_check_branch
      %91 = sbr.rel (0) target = $region33
    $region32: #{tpu_custom_call.1} parent=1 // pred_region
      %93 = vsyncadd [#allocation14], 0
      %s94 = sshll.u32 %s7, 4
      %s95 = int_to_ptr.hbm [resolvable:$true] %s94
      %s96 = sshll.u32 [#allocation13], 4
      %s97 = int_to_ptr.vmem [resolvable:$true] %s96
      %102 = dma.hbm_to_vmem [thread:$0]  %s95, 2048, %s97, [#allocation14], 128, 128, 8
    $region33: #{tpu_custom_call.1} parent=1 // pred_fallthru
      _
    // Predicated region
    $region34: #{tpu_custom_call.1} parent=1 // pred_check
      _
    $region35: #{tpu_custom_call.1} parent=1 // pred_check_branch
      %104 = sbr.rel (0) target = $region37
    $region36: #{tpu_custom_call.1} parent=1 // pred_region
      _
    $region37: #{tpu_custom_call.1} parent=1 // pred_fallthru
      _
    // Predicated region
    $region38: #{tpu_custom_call.1} parent=1 // pred_check
      _
    $region39: #{tpu_custom_call.1} parent=1 // pred_check_branch
      %106 = sbr.rel (0) target = $region41
    $region40: #{tpu_custom_call.1} parent=1 // pred_region
      _
    $region41: #{tpu_custom_call.1} parent=1 // pred_fallthru
      _
    // Predicated region
    $region42: #{tpu_custom_call.1} parent=1 // pred_check
      _
    $region43: #{tpu_custom_call.1} parent=1 // pred_check_branch
      %108 = sbr.rel (0) target = $region45
    $region44: #{tpu_custom_call.1} parent=1 // pred_region
      _
    $region45: #{tpu_custom_call.1} parent=1 // pred_fallthru
      _
    // Predicated region
    $region46: #{tpu_custom_call.1} parent=1 // pred_check
      _
    $region47: #{tpu_custom_call.1} parent=1 // pred_check_branch
      %110 = sbr.rel (0) target = $region49
    $region48: #{tpu_custom_call.1} parent=1 // pred_region
      %112 = dma.done [#allocation5], 8192
    $region49: #{tpu_custom_call.1} parent=1 // pred_fallthru
      _
    // Predicated region
    $region50: #{tpu_custom_call.1} parent=1 // pred_check
      _
    $region51: #{tpu_custom_call.1} parent=1 // pred_check_branch
      %114 = sbr.rel (0) target = $region53
    $region52: #{tpu_custom_call.1} parent=1 // pred_region
      %116 = dma.done [#allocation8], 1152
    $region53: #{tpu_custom_call.1} parent=1 // pred_fallthru
      _
    // Predicated region
    $region54: #{tpu_custom_call.1} parent=1 // pred_check
      _
    $region55: #{tpu_custom_call.1} parent=1 // pred_check_branch
      %118 = sbr.rel (0) target = $region57
    $region56: #{tpu_custom_call.1} parent=1 // pred_region
      %120 = dma.done [#allocation8], 144
    $region57: #{tpu_custom_call.1} parent=1 // pred_fallthru
      _
    // Predicated region
    $region58: #{tpu_custom_call.1} parent=1 // pred_check
      _
    $region59: #{tpu_custom_call.1} parent=1 // pred_check_branch
      %122 = sbr.rel (0) target = $region61
    $region60: #{tpu_custom_call.1} parent=1 // pred_region
      %124 = dma.done [#allocation11], 18432
    $region61: #{tpu_custom_call.1} parent=1 // pred_fallthru
      _
    // Predicated region
    $region62: #{tpu_custom_call.1} parent=1 // pred_check
      _
    $region63: #{tpu_custom_call.1} parent=1 // pred_check_branch
      %126 = sbr.rel (0) target = $region65
    $region64: #{tpu_custom_call.1} parent=1 // pred_region
      %128 = dma.done [#allocation11], 2048
    $region65: #{tpu_custom_call.1} parent=1 // pred_fallthru
      _
    // Predicated region
    $region66: #{tpu_custom_call.1} parent=1 // pred_check
      _
    $region67: #{tpu_custom_call.1} parent=1 // pred_check_branch
      %130 = sbr.rel (0) target = $region69
    $region68: #{tpu_custom_call.1} parent=1 // pred_region
      %132 = dma.done [#allocation14], 2048
    $region69: #{tpu_custom_call.1} parent=1 // pred_fallthru
      _
    %v133 = vld [vmem:[#allocation4] sm:$0xff]
    %v134 = vld [vmem:[#allocation4 + $0x8] sm:$0xff]
    %v135 = vld [vmem:[#allocation4 + $0x10] sm:$0xff]
    %v136 = vld [vmem:[#allocation4 + $0x18] sm:$0xff]
    %v137 = vld [vmem:[#allocation4 + $0x20] sm:$0xff]
    %v138 = vld [vmem:[#allocation4 + $0x28] sm:$0xff]
    %v139 = vld [vmem:[#allocation4 + $0x30] sm:$0xff]
    %v140 = vld [vmem:[#allocation4 + $0x38] sm:$0xff]
    %v141 = vld [vmem:[#allocation4 + $0x40] sm:$0xff]
    %v142 = vld [vmem:[#allocation4 + $0x48] sm:$0xff]
    %v143 = vld [vmem:[#allocation4 + $0x50] sm:$0xff]
    %v144 = vld [vmem:[#allocation4 + $0x58] sm:$0xff]
    %v145 = vld [vmem:[#allocation4 + $0x60] sm:$0xff]
    %v146 = vld [vmem:[#allocation4 + $0x68] sm:$0xff]
    %v147 = vld [vmem:[#allocation4 + $0x70] sm:$0xff]
    %v148 = vld [vmem:[#allocation4 + $0x78] sm:$0xff]
    %v149 = vld [vmem:[#allocation4 + $0x80] sm:$0xff]
    %v150 = vld [vmem:[#allocation4 + $0x88] sm:$0xff]
    %v151 = vld [vmem:[#allocation4 + $0x90] sm:$0xff]
    %v152 = vld [vmem:[#allocation4 + $0x98] sm:$0xff]
    %v153 = vld [vmem:[#allocation4 + $0xa0] sm:$0xff]
    %v154 = vld [vmem:[#allocation4 + $0xa8] sm:$0xff]
    %v155 = vld [vmem:[#allocation4 + $0xb0] sm:$0xff]
    %v156 = vld [vmem:[#allocation4 + $0xb8] sm:$0xff]
    %v157 = vld [vmem:[#allocation4 + $0xc0] sm:$0xff]
    %v158 = vld [vmem:[#allocation4 + $0xc8] sm:$0xff]
    %v159 = vld [vmem:[#allocation4 + $0xd0] sm:$0xff]
    %v160 = vld [vmem:[#allocation4 + $0xd8] sm:$0xff]
    %v161 = vld [vmem:[#allocation4 + $0xe0] sm:$0xff]
    %v162 = vld [vmem:[#allocation4 + $0xe8] sm:$0xff]
    %v163 = vld [vmem:[#allocation4 + $0xf0] sm:$0xff]
    %v164 = vld [vmem:[#allocation4 + $0xf8] sm:$0xff]
    %v165 = vld [vmem:[#allocation4 + $0x100] sm:$0xff]
    %v166 = vld [vmem:[#allocation4 + $0x108] sm:$0xff]
    %v167 = vld [vmem:[#allocation4 + $0x110] sm:$0xff]
    %v168 = vld [vmem:[#allocation4 + $0x118] sm:$0xff]
    %v169 = vld [vmem:[#allocation4 + $0x120] sm:$0xff]
    %v170 = vld [vmem:[#allocation4 + $0x128] sm:$0xff]
    %v171 = vld [vmem:[#allocation4 + $0x130] sm:$0xff]
    %v172 = vld [vmem:[#allocation4 + $0x138] sm:$0xff]
    %v173 = vld [vmem:[#allocation4 + $0x140] sm:$0xff]
    %v174 = vld [vmem:[#allocation4 + $0x148] sm:$0xff]
    %v175 = vld [vmem:[#allocation4 + $0x150] sm:$0xff]
    %v176 = vld [vmem:[#allocation4 + $0x158] sm:$0xff]
    %v177 = vld [vmem:[#allocation4 + $0x160] sm:$0xff]
    %v178 = vld [vmem:[#allocation4 + $0x168] sm:$0xff]
    %v179 = vld [vmem:[#allocation4 + $0x170] sm:$0xff]
    %v180 = vld [vmem:[#allocation4 + $0x178] sm:$0xff]
    %v181 = vld [vmem:[#allocation4 + $0x180] sm:$0xff]
    %v182 = vld [vmem:[#allocation4 + $0x188] sm:$0xff]
    %v183 = vld [vmem:[#allocation4 + $0x190] sm:$0xff]
    %v184 = vld [vmem:[#allocation4 + $0x198] sm:$0xff]
    %v185 = vld [vmem:[#allocation4 + $0x1a0] sm:$0xff]
    %v186 = vld [vmem:[#allocation4 + $0x1a8] sm:$0xff]
    %v187 = vld [vmem:[#allocation4 + $0x1b0] sm:$0xff]
    %v188 = vld [vmem:[#allocation4 + $0x1b8] sm:$0xff]
    %v189 = vld [vmem:[#allocation4 + $0x1c0] sm:$0xff]
    %v190 = vld [vmem:[#allocation4 + $0x1c8] sm:$0xff]
    %v191 = vld [vmem:[#allocation4 + $0x1d0] sm:$0xff]
    %v192 = vld [vmem:[#allocation4 + $0x1d8] sm:$0xff]
    %v193 = vld [vmem:[#allocation4 + $0x1e0] sm:$0xff]
    %v194 = vld [vmem:[#allocation4 + $0x1e8] sm:$0xff]
    %v195 = vld [vmem:[#allocation4 + $0x1f0] sm:$0xff]
    %v196 = vld [vmem:[#allocation4 + $0x1f8] sm:$0xff]
    %v197 = vld [vmem:[#allocation7] sm:$0xff]
    %v198 = vld [vmem:[#allocation7 + $0x8] sm:$0xff]
    %v199 = vld [vmem:[#allocation7 + $0x10] sm:$0xff]
    %v200 = vld [vmem:[#allocation7 + $0x18] sm:$0xff]
    %v201 = vld [vmem:[#allocation7 + $0x20] sm:$0xff]
    %v202 = vld [vmem:[#allocation7 + $0x28] sm:$0xff]
    %v203 = vld [vmem:[#allocation7 + $0x30] sm:$0xff]
    %v204 = vld [vmem:[#allocation7 + $0x38] sm:$0xff]
    %v205 = vld [vmem:[#allocation7 + $0x40] sm:$0xff]
    %vm206 = vcmask 588800
    %v208 = vsel %vm206, %v133, 0
    %v211 = vsel %vm206, %v134, 0
    %v214 = vsel %vm206, %v135, 0
    %v217 = vsel %vm206, %v136, 0
    %v220 = vsel %vm206, %v137, 0
    %v223 = vsel %vm206, %v138, 0
    %v226 = vsel %vm206, %v139, 0
    %v229 = vsel %vm206, %v140, 0
    %v232 = vsel %vm206, %v141, 0
    %v235 = vsel %vm206, %v142, 0
    %v238 = vsel %vm206, %v143, 0
    %v241 = vsel %vm206, %v144, 0
    %v244 = vsel %vm206, %v145, 0
    %v247 = vsel %vm206, %v146, 0
    %v250 = vsel %vm206, %v147, 0
    %v253 = vsel %vm206, %v148, 0
    %v256 = vsel %vm206, %v149, 0
    %v259 = vsel %vm206, %v150, 0
    %v262 = vsel %vm206, %v151, 0
    %v265 = vsel %vm206, %v152, 0
    %v268 = vsel %vm206, %v153, 0
    %v271 = vsel %vm206, %v154, 0
    %v274 = vsel %vm206, %v155, 0
    %v277 = vsel %vm206, %v156, 0
    %v280 = vsel %vm206, %v157, 0
    %v283 = vsel %vm206, %v158, 0
    %v286 = vsel %vm206, %v159, 0
    %v289 = vsel %vm206, %v160, 0
    %v292 = vsel %vm206, %v161, 0
    %v295 = vsel %vm206, %v162, 0
    %v298 = vsel %vm206, %v163, 0
    %v301 = vsel %vm206, %v164, 0
    %v304 = vsel %vm206, %v165, 0
    %v307 = vsel %vm206, %v166, 0
    %v310 = vsel %vm206, %v167, 0
    %v313 = vsel %vm206, %v168, 0
    %v316 = vsel %vm206, %v169, 0
    %v319 = vsel %vm206, %v170, 0
    %v322 = vsel %vm206, %v171, 0
    %v325 = vsel %vm206, %v172, 0
    %v328 = vsel %vm206, %v173, 0
    %v331 = vsel %vm206, %v174, 0
    %v334 = vsel %vm206, %v175, 0
    %v337 = vsel %vm206, %v176, 0
    %v340 = vsel %vm206, %v177, 0
    %v343 = vsel %vm206, %v178, 0
    %v346 = vsel %vm206, %v179, 0
    %v349 = vsel %vm206, %v180, 0
    %v352 = vsel %vm206, %v181, 0
    %v355 = vsel %vm206, %v182, 0
    %v358 = vsel %vm206, %v183, 0
    %v361 = vsel %vm206, %v184, 0
    %v364 = vsel %vm206, %v185, 0
    %v367 = vsel %vm206, %v186, 0
    %v370 = vsel %vm206, %v187, 0
    %v373 = vsel %vm206, %v188, 0
    %v376 = vsel %vm206, %v189, 0
    %v379 = vsel %vm206, %v190, 0
    %v382 = vsel %vm206, %v191, 0
    %v385 = vsel %vm206, %v192, 0
    %v388 = vsel %vm206, %v193, 0
    %v391 = vsel %vm206, %v194, 0
    %v394 = vsel %vm206, %v195, 0
    %v397 = vsel %vm206, %v196, 0
    %399 = vmatpush.msra.mxu0 0.0
    %400 = vmatpush.msra.mxu0 0.0
    %401 = vmatpush.msra.mxu0 0.0
    %402 = vmatpush.msra.mxu0 0.0
    %403 = vmatpush.msra.mxu0 0.0
    %404 = vmatpush.msra.mxu0 0.0
    %405 = vmatpush.msra.mxu0 0.0
    %406 = vmatpush.msra.mxu0 %v205
    %407 = vmatpush.msra.mxu0 %v204
    %408 = vmatpush.msra.mxu0 %v203
    %409 = vmatpush.msra.mxu0 %v202
    %410 = vmatpush.msra.mxu0 %v201
    %411 = vmatpush.msra.mxu0 %v200
    %412 = vmatpush.msra.mxu0 %v199
    %413 = vmatpush.msra.mxu0 %v198
    %414 = vmatpush.msra.mxu0 %v197
    %415 = vmatmul.f32.gmra.mxu0 %v208
    %v416 = vpop.f32.mrf.mxu0
    %v417 = vadd.f32 0.0, %v416
    %418 = vmatmul.f32.gmra.mxu0 %v211
    %v419 = vpop.f32.mrf.mxu0
    %v420 = vadd.f32 0.0, %v419
    %421 = vmatmul.f32.gmra.mxu0 %v214
    %v422 = vpop.f32.mrf.mxu0
    %v423 = vadd.f32 0.0, %v422
    %424 = vmatmul.f32.gmra.mxu0 %v217
    %v425 = vpop.f32.mrf.mxu0
    %v426 = vadd.f32 0.0, %v425
    %427 = vmatmul.f32.gmra.mxu0 %v220
    %v428 = vpop.f32.mrf.mxu0
    %v429 = vadd.f32 0.0, %v428
    %430 = vmatmul.f32.gmra.mxu0 %v223
    %v431 = vpop.f32.mrf.mxu0
    %v432 = vadd.f32 0.0, %v431
    %433 = vmatmul.f32.gmra.mxu0 %v226
    %v434 = vpop.f32.mrf.mxu0
    %435 = vmatmul.f32.gmra.mxu0 %v229
    %v436 = vpop.f32.mrf.mxu0
    %437 = vmatmul.f32.gmra.mxu0 %v232
    %v438 = vpop.f32.mrf.mxu0
    %v439 = vadd.f32 0.0, %v438
    %440 = vmatmul.f32.gmra.mxu0 %v235
    %v441 = vpop.f32.mrf.mxu0
    %v442 = vadd.f32 0.0, %v441
    %443 = vmatmul.f32.gmra.mxu0 %v238
    %v444 = vpop.f32.mrf.mxu0
    %v445 = vadd.f32 0.0, %v444
    %446 = vmatmul.f32.gmra.mxu0 %v241
    %v447 = vpop.f32.mrf.mxu0
    %v448 = vadd.f32 0.0, %v447
    %449 = vmatmul.f32.gmra.mxu0 %v244
    %v450 = vpop.f32.mrf.mxu0
    %v451 = vadd.f32 0.0, %v450
    %452 = vmatmul.f32.gmra.mxu0 %v247
    %v453 = vpop.f32.mrf.mxu0
    %v454 = vadd.f32 0.0, %v453
    %455 = vmatmul.f32.gmra.mxu0 %v250
    %v456 = vpop.f32.mrf.mxu0
    %457 = vmatmul.f32.gmra.mxu0 %v253
    %v458 = vpop.f32.mrf.mxu0
    %459 = vmatmul.f32.gmra.mxu0 %v256
    %v460 = vpop.f32.mrf.mxu0
    %v461 = vadd.f32 0.0, %v460
    %462 = vmatmul.f32.gmra.mxu0 %v259
    %v463 = vpop.f32.mrf.mxu0
    %v464 = vadd.f32 0.0, %v463
    %465 = vmatmul.f32.gmra.mxu0 %v262
    %v466 = vpop.f32.mrf.mxu0
    %v467 = vadd.f32 0.0, %v466
    %468 = vmatmul.f32.gmra.mxu0 %v265
    %v469 = vpop.f32.mrf.mxu0
    %v470 = vadd.f32 0.0, %v469
    %471 = vmatmul.f32.gmra.mxu0 %v268
    %v472 = vpop.f32.mrf.mxu0
    %v473 = vadd.f32 0.0, %v472
    %474 = vmatmul.f32.gmra.mxu0 %v271
    %v475 = vpop.f32.mrf.mxu0
    %v476 = vadd.f32 0.0, %v475
    %477 = vmatmul.f32.gmra.mxu0 %v274
    %v478 = vpop.f32.mrf.mxu0
    %479 = vmatmul.f32.gmra.mxu0 %v277
    %v480 = vpop.f32.mrf.mxu0
    %481 = vmatmul.f32.gmra.mxu0 %v280
    %v482 = vpop.f32.mrf.mxu0
    %v483 = vadd.f32 0.0, %v482
    %484 = vmatmul.f32.gmra.mxu0 %v283
    %v485 = vpop.f32.mrf.mxu0
    %v486 = vadd.f32 0.0, %v485
    %487 = vmatmul.f32.gmra.mxu0 %v286
    %v488 = vpop.f32.mrf.mxu0
    %v489 = vadd.f32 0.0, %v488
    %490 = vmatmul.f32.gmra.mxu0 %v289
    %v491 = vpop.f32.mrf.mxu0
    %v492 = vadd.f32 0.0, %v491
    %493 = vmatmul.f32.gmra.mxu0 %v292
    %v494 = vpop.f32.mrf.mxu0
    %v495 = vadd.f32 0.0, %v494
    %496 = vmatmul.f32.gmra.mxu0 %v295
    %v497 = vpop.f32.mrf.mxu0
    %v498 = vadd.f32 0.0, %v497
    %499 = vmatmul.f32.gmra.mxu0 %v298
    %v500 = vpop.f32.mrf.mxu0
    %501 = vmatmul.f32.gmra.mxu0 %v301
    %v502 = vpop.f32.mrf.mxu0
    %503 = vmatmul.f32.gmra.mxu0 %v304
    %v504 = vpop.f32.mrf.mxu0
    %v505 = vadd.f32 0.0, %v504
    %506 = vmatmul.f32.gmra.mxu0 %v307
    %v507 = vpop.f32.mrf.mxu0
    %v508 = vadd.f32 0.0, %v507
    %509 = vmatmul.f32.gmra.mxu0 %v310
    %v510 = vpop.f32.mrf.mxu0
    %v511 = vadd.f32 0.0, %v510
    %512 = vmatmul.f32.gmra.mxu0 %v313
    %v513 = vpop.f32.mrf.mxu0
    %v514 = vadd.f32 0.0, %v513
    %515 = vmatmul.f32.gmra.mxu0 %v316
    %v516 = vpop.f32.mrf.mxu0
    %v517 = vadd.f32 0.0, %v516
    %518 = vmatmul.f32.gmra.mxu0 %v319
    %v519 = vpop.f32.mrf.mxu0
    %v520 = vadd.f32 0.0, %v519
    %521 = vmatmul.f32.gmra.mxu0 %v322
    %v522 = vpop.f32.mrf.mxu0
    %523 = vmatmul.f32.gmra.mxu0 %v325
    %v524 = vpop.f32.mrf.mxu0
    %525 = vmatmul.f32.gmra.mxu0 %v328
    %v526 = vpop.f32.mrf.mxu0
    %v527 = vadd.f32 0.0, %v526
    %528 = vmatmul.f32.gmra.mxu0 %v331
    %v529 = vpop.f32.mrf.mxu0
    %v530 = vadd.f32 0.0, %v529
    %531 = vmatmul.f32.gmra.mxu0 %v334
    %v532 = vpop.f32.mrf.mxu0
    %v533 = vadd.f32 0.0, %v532
    %534 = vmatmul.f32.gmra.mxu0 %v337
    %v535 = vpop.f32.mrf.mxu0
    %v536 = vadd.f32 0.0, %v535
    %537 = vmatmul.f32.gmra.mxu0 %v340
    %v538 = vpop.f32.mrf.mxu0
    %v539 = vadd.f32 0.0, %v538
    %540 = vmatmul.f32.gmra.mxu0 %v343
    %v541 = vpop.f32.mrf.mxu0
    %v542 = vadd.f32 0.0, %v541
    %543 = vmatmul.f32.gmra.mxu0 %v346
    %v544 = vpop.f32.mrf.mxu0
    %545 = vmatmul.f32.gmra.mxu0 %v349
    %v546 = vpop.f32.mrf.mxu0
    %547 = vmatmul.f32.gmra.mxu0 %v352
    %v548 = vpop.f32.mrf.mxu0
    %v549 = vadd.f32 0.0, %v548
    %550 = vmatmul.f32.gmra.mxu0 %v355
    %v551 = vpop.f32.mrf.mxu0
    %v552 = vadd.f32 0.0, %v551
    %553 = vmatmul.f32.gmra.mxu0 %v358
    %v554 = vpop.f32.mrf.mxu0
    %v555 = vadd.f32 0.0, %v554
    %556 = vmatmul.f32.gmra.mxu0 %v361
    %v557 = vpop.f32.mrf.mxu0
    %v558 = vadd.f32 0.0, %v557
    %559 = vmatmul.f32.gmra.mxu0 %v364
    %v560 = vpop.f32.mrf.mxu0
    %v561 = vadd.f32 0.0, %v560
    %562 = vmatmul.f32.gmra.mxu0 %v367
    %v563 = vpop.f32.mrf.mxu0
    %v564 = vadd.f32 0.0, %v563
    %565 = vmatmul.f32.gmra.mxu0 %v370
    %v566 = vpop.f32.mrf.mxu0
    %567 = vmatmul.f32.gmra.mxu0 %v373
    %v568 = vpop.f32.mrf.mxu0
    %569 = vmatmul.f32.gmra.mxu0 %v376
    %v570 = vpop.f32.mrf.mxu0
    %v571 = vadd.f32 0.0, %v570
    %572 = vmatmul.f32.gmra.mxu0 %v379
    %v573 = vpop.f32.mrf.mxu0
    %v574 = vadd.f32 0.0, %v573
    %575 = vmatmul.f32.gmra.mxu0 %v382
    %v576 = vpop.f32.mrf.mxu0
    %v577 = vadd.f32 0.0, %v576
    %578 = vmatmul.f32.gmra.mxu0 %v385
    %v579 = vpop.f32.mrf.mxu0
    %v580 = vadd.f32 0.0, %v579
    %581 = vmatmul.f32.gmra.mxu0 %v388
    %v582 = vpop.f32.mrf.mxu0
    %v583 = vadd.f32 0.0, %v582
    %584 = vmatmul.f32.gmra.mxu0 %v391
    %v585 = vpop.f32.mrf.mxu0
    %v586 = vadd.f32 0.0, %v585
    %587 = vmatmul.f32.gmra.mxu0 %v394
    %v588 = vpop.f32.mrf.mxu0
    %589 = vmatmul.f32.gmra.mxu0 %v397
    %v590 = vpop.f32.mrf.mxu0
    %591 = vdwg.mxu0
    %v592 = vmax.f32 %v417, %v420
    %v593 = vmax.f32 %v439, %v442
    %v594 = vmax.f32 %v461, %v464
    %v595 = vmax.f32 %v483, %v486
    %v596 = vmax.f32 %v505, %v508
    %v597 = vmax.f32 %v527, %v530
    %v598 = vmax.f32 %v549, %v552
    %v599 = vmax.f32 %v571, %v574
    %v608 = vrot.slane %v592, 1
    %v609 = vrot.slane %v593, 1
    %v610 = vrot.slane %v594, 1
    %v611 = vrot.slane %v595, 1
    %v612 = vrot.slane %v596, 1
    %v613 = vrot.slane %v597, 1
    %v614 = vrot.slane %v598, 1
    %v615 = vrot.slane %v599, 1
    %v624 = vmax.f32 %v592, %v608
    %v625 = vmax.f32 %v593, %v609
    %v626 = vmax.f32 %v594, %v610
    %v627 = vmax.f32 %v595, %v611
    %v628 = vmax.f32 %v596, %v612
    %v629 = vmax.f32 %v597, %v613
    %v630 = vmax.f32 %v598, %v614
    %v631 = vmax.f32 %v599, %v615
    %v640 = vrot.slane %v625, 7
    %vm641 = vcmask 1041409
    %v642 = vsel %vm641, %v640, %v624
    %v643 = vrot.slane %v626, 6
    %vm644 = vcmask 1042434
    %v645 = vsel %vm644, %v643, %v642
    %v646 = vrot.slane %v627, 5
    %vm647 = vcmask 1043459
    %v648 = vsel %vm647, %v646, %v645
    %v649 = vrot.slane %v628, 4
    %vm650 = vcmask 1044484
    %v651 = vsel %vm650, %v649, %v648
    %v652 = vrot.slane %v629, 3
    %vm653 = vcmask 1045509
    %v654 = vsel %vm653, %v652, %v651
    %v655 = vrot.slane %v630, 2
    %vm656 = vcmask 1046534
    %v657 = vsel %vm656, %v655, %v654
    %v658 = vrot.slane %v631, 1
    %vm659 = vcmask 1047559
    %v660 = vsel %vm659, %v658, %v657
    %662 = vst [vmem:[#allocation2] sm:$0xff] %v660
    %v663 = vrot.slane %v624, 2
    %v664 = vrot.slane %v625, 1
    %v665 = vsel %vm641, %v664, %v663
    %v666 = vsel %vm644, %v626, %v665
    %v667 = vrot.slane %v627, 7
    %v668 = vsel %vm647, %v667, %v666
    %v669 = vrot.slane %v628, 6
    %v670 = vsel %vm650, %v669, %v668
    %v671 = vrot.slane %v629, 5
    %v672 = vsel %vm653, %v671, %v670
    %v673 = vrot.slane %v630, 4
    %v674 = vsel %vm656, %v673, %v672
    %v675 = vrot.slane %v631, 3
    %v676 = vsel %vm659, %v675, %v674
    %678 = vst [vmem:[#allocation2 + $0x8] sm:$0xff] %v676
    %v679 = vrot.slane %v624, 4
    %v680 = vrot.slane %v625, 3
    %v681 = vsel %vm641, %v680, %v679
    %v682 = vrot.slane %v626, 2
    %v683 = vsel %vm644, %v682, %v681
    %v684 = vrot.slane %v627, 1
    %v685 = vsel %vm647, %v684, %v683
    %v686 = vsel %vm650, %v628, %v685
    %v687 = vrot.slane %v629, 7
    %v688 = vsel %vm653, %v687, %v686
    %v689 = vrot.slane %v630, 6
    %v690 = vsel %vm656, %v689, %v688
    %v691 = vrot.slane %v631, 5
    %v692 = vsel %vm659, %v691, %v690
    %694 = vst [vmem:[#allocation2 + $0x10] sm:$0xff] %v692
    %v695 = vmax.f32 %v423, %v426
    %v696 = vmax.f32 %v445, %v448
    %v697 = vmax.f32 %v467, %v470
    %v698 = vmax.f32 %v489, %v492
    %v699 = vmax.f32 %v511, %v514
    %v700 = vmax.f32 %v533, %v536
    %v701 = vmax.f32 %v555, %v558
    %v702 = vmax.f32 %v577, %v580
    %v711 = vrot.slane %v695, 1
    %v712 = vrot.slane %v696, 1
    %v713 = vrot.slane %v697, 1
    %v714 = vrot.slane %v698, 1
    %v715 = vrot.slane %v699, 1
    %v716 = vrot.slane %v700, 1
    %v717 = vrot.slane %v701, 1
    %v718 = vrot.slane %v702, 1
    %v727 = vmax.f32 %v695, %v711
    %v728 = vmax.f32 %v696, %v712
    %v729 = vmax.f32 %v697, %v713
    %v730 = vmax.f32 %v698, %v714
    %v731 = vmax.f32 %v699, %v715
    %v732 = vmax.f32 %v700, %v716
    %v733 = vmax.f32 %v701, %v717
    %v734 = vmax.f32 %v702, %v718
    %v743 = vrot.slane %v728, 7
    %v744 = vsel %vm641, %v743, %v727
    %v745 = vrot.slane %v729, 6
    %v746 = vsel %vm644, %v745, %v744
    %v747 = vrot.slane %v730, 5
    %v748 = vsel %vm647, %v747, %v746
    %v749 = vrot.slane %v731, 4
    %v750 = vsel %vm650, %v749, %v748
    %v751 = vrot.slane %v732, 3
    %v752 = vsel %vm653, %v751, %v750
    %v753 = vrot.slane %v733, 2
    %v754 = vsel %vm656, %v753, %v752
    %v755 = vrot.slane %v734, 1
    %v756 = vsel %vm659, %v755, %v754
    %758 = vst [vmem:[#allocation2 + $0x18] sm:$0xff] %v756
    %v759 = vrot.slane %v727, 2
    %v760 = vrot.slane %v728, 1
    %v761 = vsel %vm641, %v760, %v759
    %v762 = vsel %vm644, %v729, %v761
    %v763 = vrot.slane %v730, 7
    %v764 = vsel %vm647, %v763, %v762
    %v765 = vrot.slane %v731, 6
    %v766 = vsel %vm650, %v765, %v764
    %v767 = vrot.slane %v732, 5
    %v768 = vsel %vm653, %v767, %v766
    %v769 = vrot.slane %v733, 4
    %v770 = vsel %vm656, %v769, %v768
    %v771 = vrot.slane %v734, 3
    %v772 = vsel %vm659, %v771, %v770
    %774 = vst [vmem:[#allocation2 + $0x20] sm:$0xff] %v772
    %v775 = vrot.slane %v727, 4
    %v776 = vrot.slane %v728, 3
    %v777 = vsel %vm641, %v776, %v775
    %v778 = vrot.slane %v729, 2
    %v779 = vsel %vm644, %v778, %v777
    %v780 = vrot.slane %v730, 1
    %v781 = vsel %vm647, %v780, %v779
    %v782 = vsel %vm650, %v731, %v781
    %v783 = vrot.slane %v732, 7
    %v784 = vsel %vm653, %v783, %v782
    %v785 = vrot.slane %v733, 6
    %v786 = vsel %vm656, %v785, %v784
    %v787 = vrot.slane %v734, 5
    %v788 = vsel %vm659, %v787, %v786
    %790 = vst [vmem:[#allocation2 + $0x28] sm:$0xff] %v788
    %v791 = vmax.f32 %v429, %v432
    %v792 = vmax.f32 %v451, %v454
    %v793 = vmax.f32 %v473, %v476
    %v794 = vmax.f32 %v495, %v498
    %v795 = vmax.f32 %v517, %v520
    %v796 = vmax.f32 %v539, %v542
    %v797 = vmax.f32 %v561, %v564
    %v798 = vmax.f32 %v583, %v586
    %v807 = vrot.slane %v791, 1
    %v808 = vrot.slane %v792, 1
    %v809 = vrot.slane %v793, 1
    %v810 = vrot.slane %v794, 1
    %v811 = vrot.slane %v795, 1
    %v812 = vrot.slane %v796, 1
    %v813 = vrot.slane %v797, 1
    %v814 = vrot.slane %v798, 1
    %v823 = vmax.f32 %v791, %v807
    %v824 = vmax.f32 %v792, %v808
    %v825 = vmax.f32 %v793, %v809
    %v826 = vmax.f32 %v794, %v810
    %v827 = vmax.f32 %v795, %v811
    %v828 = vmax.f32 %v796, %v812
    %v829 = vmax.f32 %v797, %v813
    %v830 = vmax.f32 %v798, %v814
    %v839 = vrot.slane %v824, 7
    %v840 = vsel %vm641, %v839, %v823
    %v841 = vrot.slane %v825, 6
    %v842 = vsel %vm644, %v841, %v840
    %v843 = vrot.slane %v826, 5
    %v844 = vsel %vm647, %v843, %v842
    %v845 = vrot.slane %v827, 4
    %v846 = vsel %vm650, %v845, %v844
    %v847 = vrot.slane %v828, 3
    %v848 = vsel %vm653, %v847, %v846
    %v849 = vrot.slane %v829, 2
    %v850 = vsel %vm656, %v849, %v848
    %v851 = vrot.slane %v830, 1
    %v852 = vsel %vm659, %v851, %v850
    %854 = vst [vmem:[#allocation2 + $0x30] sm:$0xff] %v852
    %v855 = vrot.slane %v823, 2
    %v856 = vrot.slane %v824, 1
    %v857 = vsel %vm641, %v856, %v855
    %v858 = vsel %vm644, %v825, %v857
    %v859 = vrot.slane %v826, 7
    %v860 = vsel %vm647, %v859, %v858
    %v861 = vrot.slane %v827, 6
    %v862 = vsel %vm650, %v861, %v860
    %v863 = vrot.slane %v828, 5
    %v864 = vsel %vm653, %v863, %v862
    %v865 = vrot.slane %v829, 4
    %v866 = vsel %vm656, %v865, %v864
    %v867 = vrot.slane %v830, 3
    %v868 = vsel %vm659, %v867, %v866
    %870 = vst [vmem:[#allocation2 + $0x38] sm:$0xff] %v868
    %v871 = vrot.slane %v823, 4
    %v872 = vrot.slane %v824, 3
    %v873 = vsel %vm641, %v872, %v871
    %v874 = vrot.slane %v825, 2
    %v875 = vsel %vm644, %v874, %v873
    %v876 = vrot.slane %v826, 1
    %v877 = vsel %vm647, %v876, %v875
    %v878 = vsel %vm650, %v827, %v877
    %v879 = vrot.slane %v828, 7
    %v880 = vsel %vm653, %v879, %v878
    %v881 = vrot.slane %v829, 6
    %v882 = vsel %vm656, %v881, %v880
    %v883 = vrot.slane %v830, 5
    %v884 = vsel %vm659, %v883, %v882
    %886 = vst [vmem:[#allocation2 + $0x40] sm:$0xff] %v884
    %v887 = vld [vmem:[#allocation2] sm:$0xff]
    %v888 = vld [vmem:[#allocation2 + $0x8] sm:$0xff]
    %v889 = vld [vmem:[#allocation2 + $0x10] sm:$0xff]
    %v890 = vld [vmem:[#allocation2 + $0x18] sm:$0xff]
    %v891 = vld [vmem:[#allocation2 + $0x20] sm:$0xff]
    %v892 = vld [vmem:[#allocation2 + $0x28] sm:$0xff]
    %v893 = vld [vmem:[#allocation2 + $0x30] sm:$0xff]
    %v894 = vld [vmem:[#allocation2 + $0x38] sm:$0xff]
    %v895 = vld [vmem:[#allocation2 + $0x40] sm:$0xff]
    %v896 = vld [vmem:[#allocation9] sm:$0xff]
    %v897 = vld [vmem:[#allocation9 + $0x8] sm:$0x1]
    %v900 = vperm.slane %v896, 0
    %v901 = vperm.slane %v896, 1
    %v902 = vperm.slane %v896, 2
    %v903 = vperm.slane %v896, 3
    %v904 = vperm.slane %v896, 4
    %v905 = vperm.slane %v896, 5
    %v906 = vperm.slane %v896, 6
    %v907 = vperm.slane %v896, 7
    %v908 = vperm.slane %v897, 0
    %v918 = vadd.f32 %v887, %v900
    %v919 = vadd.f32 %v888, %v901
    %v920 = vadd.f32 %v889, %v902
    %v921 = vadd.f32 %v890, %v903
    %v922 = vadd.f32 %v891, %v904
    %v923 = vadd.f32 %v892, %v905
    %v924 = vadd.f32 %v893, %v906
    %v925 = vadd.f32 %v894, %v907
    %v926 = vadd.f32 %v895, %v908
    %vm927 = vcmp.ge.f32.partialorder %v918, 0.0
    %vm928 = vcmp.ge.f32.partialorder %v919, 0.0
    %vm929 = vcmp.ge.f32.partialorder %v920, 0.0
    %vm930 = vcmp.ge.f32.partialorder %v921, 0.0
    %vm931 = vcmp.ge.f32.partialorder %v922, 0.0
    %vm932 = vcmp.ge.f32.partialorder %v923, 0.0
    %vm933 = vcmp.ge.f32.partialorder %v924, 0.0
    %vm934 = vcmp.ge.f32.partialorder %v925, 0.0
    %vm935 = vcmp.ge.f32.partialorder %v926, 0.0
    %v936 = vmul.f32 %v918, 0.02
    %v937 = vmul.f32 %v919, 0.02
    %v938 = vmul.f32 %v920, 0.02
    %v939 = vmul.f32 %v921, 0.02
    %v940 = vmul.f32 %v922, 0.02
    %v941 = vmul.f32 %v923, 0.02
    %v942 = vmul.f32 %v924, 0.02
    %v943 = vmul.f32 %v925, 0.02
    %v944 = vmul.f32 %v926, 0.02
    %v945 = vsel %vm927, %v918, %v936
    %v946 = vsel %vm928, %v919, %v937
    %v947 = vsel %vm929, %v920, %v938
    %v948 = vsel %vm930, %v921, %v939
    %v949 = vsel %vm931, %v922, %v940
    %v950 = vsel %vm932, %v923, %v941
    %v951 = vsel %vm933, %v924, %v942
    %v952 = vsel %vm934, %v925, %v943
    %v953 = vsel %vm935, %v926, %v944
    %v954 = vld [vmem:[#allocation10] sm:$0xff]
    %v955 = vld [vmem:[#allocation10 + $0x8] sm:$0xff]
    %v956 = vld [vmem:[#allocation10 + $0x10] sm:$0xff]
    %v957 = vld [vmem:[#allocation10 + $0x18] sm:$0xff]
    %v958 = vld [vmem:[#allocation10 + $0x20] sm:$0xff]
    %v959 = vld [vmem:[#allocation10 + $0x28] sm:$0xff]
    %v960 = vld [vmem:[#allocation10 + $0x30] sm:$0xff]
    %v961 = vld [vmem:[#allocation10 + $0x38] sm:$0xff]
    %v962 = vld [vmem:[#allocation10 + $0x40] sm:$0xff]
    %v963 = vld [vmem:[#allocation10 + $0x48] sm:$0xff]
    %v964 = vld [vmem:[#allocation10 + $0x50] sm:$0xff]
    %v965 = vld [vmem:[#allocation10 + $0x58] sm:$0xff]
    %v966 = vld [vmem:[#allocation10 + $0x60] sm:$0xff]
    %v967 = vld [vmem:[#allocation10 + $0x68] sm:$0xff]
    %v968 = vld [vmem:[#allocation10 + $0x70] sm:$0xff]
    %v969 = vld [vmem:[#allocation10 + $0x78] sm:$0xff]
    %v970 = vld [vmem:[#allocation10 + $0x80] sm:$0xff]
    %v971 = vld [vmem:[#allocation10 + $0x88] sm:$0xff]
    %v972 = vld [vmem:[#allocation10 + $0x90] sm:$0xff]
    %v973 = vld [vmem:[#allocation10 + $0x98] sm:$0xff]
    %v974 = vld [vmem:[#allocation10 + $0xa0] sm:$0xff]
    %v975 = vld [vmem:[#allocation10 + $0xa8] sm:$0xff]
    %v976 = vld [vmem:[#allocation10 + $0xb0] sm:$0xff]
    %v977 = vld [vmem:[#allocation10 + $0xb8] sm:$0xff]
    %v978 = vld [vmem:[#allocation10 + $0xc0] sm:$0xff]
    %v979 = vld [vmem:[#allocation10 + $0xc8] sm:$0xff]
    %v980 = vld [vmem:[#allocation10 + $0xd0] sm:$0xff]
    %v981 = vld [vmem:[#allocation10 + $0xd8] sm:$0xff]
    %v982 = vld [vmem:[#allocation10 + $0xe0] sm:$0xff]
    %v983 = vld [vmem:[#allocation10 + $0xe8] sm:$0xff]
    %v984 = vld [vmem:[#allocation10 + $0xf0] sm:$0xff]
    %v985 = vld [vmem:[#allocation10 + $0xf8] sm:$0xff]
    %v986 = vld [vmem:[#allocation10 + $0x100] sm:$0xff]
    %v987 = vld [vmem:[#allocation10 + $0x108] sm:$0xff]
    %v988 = vld [vmem:[#allocation10 + $0x110] sm:$0xff]
    %v989 = vld [vmem:[#allocation10 + $0x118] sm:$0xff]
    %v990 = vld [vmem:[#allocation10 + $0x120] sm:$0xff]
    %v991 = vld [vmem:[#allocation10 + $0x128] sm:$0xff]
    %v992 = vld [vmem:[#allocation10 + $0x130] sm:$0xff]
    %v993 = vld [vmem:[#allocation10 + $0x138] sm:$0xff]
    %v994 = vld [vmem:[#allocation10 + $0x140] sm:$0xff]
    %v995 = vld [vmem:[#allocation10 + $0x148] sm:$0xff]
    %v996 = vld [vmem:[#allocation10 + $0x150] sm:$0xff]
    %v997 = vld [vmem:[#allocation10 + $0x158] sm:$0xff]
    %v998 = vld [vmem:[#allocation10 + $0x160] sm:$0xff]
    %v999 = vld [vmem:[#allocation10 + $0x168] sm:$0xff]
    %v1000 = vld [vmem:[#allocation10 + $0x170] sm:$0xff]
    %v1001 = vld [vmem:[#allocation10 + $0x178] sm:$0xff]
    %v1002 = vld [vmem:[#allocation10 + $0x180] sm:$0xff]
    %v1003 = vld [vmem:[#allocation10 + $0x188] sm:$0xff]
    %v1004 = vld [vmem:[#allocation10 + $0x190] sm:$0xff]
    %v1005 = vld [vmem:[#allocation10 + $0x198] sm:$0xff]
    %v1006 = vld [vmem:[#allocation10 + $0x1a0] sm:$0xff]
    %v1007 = vld [vmem:[#allocation10 + $0x1a8] sm:$0xff]
    %v1008 = vld [vmem:[#allocation10 + $0x1b0] sm:$0xff]
    %v1009 = vld [vmem:[#allocation10 + $0x1b8] sm:$0xff]
    %v1010 = vld [vmem:[#allocation10 + $0x1c0] sm:$0xff]
    %v1011 = vld [vmem:[#allocation10 + $0x1c8] sm:$0xff]
    %v1012 = vld [vmem:[#allocation10 + $0x1d0] sm:$0xff]
    %v1013 = vld [vmem:[#allocation10 + $0x1d8] sm:$0xff]
    %v1014 = vld [vmem:[#allocation10 + $0x1e0] sm:$0xff]
    %v1015 = vld [vmem:[#allocation10 + $0x1e8] sm:$0xff]
    %v1016 = vld [vmem:[#allocation10 + $0x1f0] sm:$0xff]
    %v1017 = vld [vmem:[#allocation10 + $0x1f8] sm:$0xff]
    %v1018 = vld [vmem:[#allocation10 + $0x200] sm:$0xff]
    %v1019 = vld [vmem:[#allocation10 + $0x208] sm:$0xff]
    %v1020 = vld [vmem:[#allocation10 + $0x210] sm:$0xff]
    %v1021 = vld [vmem:[#allocation10 + $0x218] sm:$0xff]
    %v1022 = vld [vmem:[#allocation10 + $0x220] sm:$0xff]
    %v1023 = vld [vmem:[#allocation10 + $0x228] sm:$0xff]
    %v1024 = vld [vmem:[#allocation10 + $0x230] sm:$0xff]
    %v1025 = vld [vmem:[#allocation10 + $0x238] sm:$0xff]
    %v1026 = vld [vmem:[#allocation10 + $0x240] sm:$0xff]
    %v1027 = vld [vmem:[#allocation10 + $0x248] sm:$0xff]
    %v1028 = vld [vmem:[#allocation10 + $0x250] sm:$0xff]
    %v1029 = vld [vmem:[#allocation10 + $0x258] sm:$0xff]
    %v1030 = vld [vmem:[#allocation10 + $0x260] sm:$0xff]
    %v1031 = vld [vmem:[#allocation10 + $0x268] sm:$0xff]
    %v1032 = vld [vmem:[#allocation10 + $0x270] sm:$0xff]
    %v1033 = vld [vmem:[#allocation10 + $0x278] sm:$0xff]
    %v1034 = vld [vmem:[#allocation10 + $0x280] sm:$0xff]
    %v1035 = vld [vmem:[#allocation10 + $0x288] sm:$0xff]
    %v1036 = vld [vmem:[#allocation10 + $0x290] sm:$0xff]
    %v1037 = vld [vmem:[#allocation10 + $0x298] sm:$0xff]
    %v1038 = vld [vmem:[#allocation10 + $0x2a0] sm:$0xff]
    %v1039 = vld [vmem:[#allocation10 + $0x2a8] sm:$0xff]
    %v1040 = vld [vmem:[#allocation10 + $0x2b0] sm:$0xff]
    %v1041 = vld [vmem:[#allocation10 + $0x2b8] sm:$0xff]
    %v1042 = vld [vmem:[#allocation10 + $0x2c0] sm:$0xff]
    %v1043 = vld [vmem:[#allocation10 + $0x2c8] sm:$0xff]
    %v1044 = vld [vmem:[#allocation10 + $0x2d0] sm:$0xff]
    %v1045 = vld [vmem:[#allocation10 + $0x2d8] sm:$0xff]
    %v1046 = vld [vmem:[#allocation10 + $0x2e0] sm:$0xff]
    %v1047 = vld [vmem:[#allocation10 + $0x2e8] sm:$0xff]
    %v1048 = vld [vmem:[#allocation10 + $0x2f0] sm:$0xff]
    %v1049 = vld [vmem:[#allocation10 + $0x2f8] sm:$0xff]
    %v1050 = vld [vmem:[#allocation10 + $0x300] sm:$0xff]
    %v1051 = vld [vmem:[#allocation10 + $0x308] sm:$0xff]
    %v1052 = vld [vmem:[#allocation10 + $0x310] sm:$0xff]
    %v1053 = vld [vmem:[#allocation10 + $0x318] sm:$0xff]
    %v1054 = vld [vmem:[#allocation10 + $0x320] sm:$0xff]
    %v1055 = vld [vmem:[#allocation10 + $0x328] sm:$0xff]
    %v1056 = vld [vmem:[#allocation10 + $0x330] sm:$0xff]
    %v1057 = vld [vmem:[#allocation10 + $0x338] sm:$0xff]
    %v1058 = vld [vmem:[#allocation10 + $0x340] sm:$0xff]
    %v1059 = vld [vmem:[#allocation10 + $0x348] sm:$0xff]
    %v1060 = vld [vmem:[#allocation10 + $0x350] sm:$0xff]
    %v1061 = vld [vmem:[#allocation10 + $0x358] sm:$0xff]
    %v1062 = vld [vmem:[#allocation10 + $0x360] sm:$0xff]
    %v1063 = vld [vmem:[#allocation10 + $0x368] sm:$0xff]
    %v1064 = vld [vmem:[#allocation10 + $0x370] sm:$0xff]
    %v1065 = vld [vmem:[#allocation10 + $0x378] sm:$0xff]
    %v1066 = vld [vmem:[#allocation10 + $0x380] sm:$0xff]
    %v1067 = vld [vmem:[#allocation10 + $0x388] sm:$0xff]
    %v1068 = vld [vmem:[#allocation10 + $0x390] sm:$0xff]
    %v1069 = vld [vmem:[#allocation10 + $0x398] sm:$0xff]
    %v1070 = vld [vmem:[#allocation10 + $0x3a0] sm:$0xff]
    %v1071 = vld [vmem:[#allocation10 + $0x3a8] sm:$0xff]
    %v1072 = vld [vmem:[#allocation10 + $0x3b0] sm:$0xff]
    %v1073 = vld [vmem:[#allocation10 + $0x3b8] sm:$0xff]
    %v1074 = vld [vmem:[#allocation10 + $0x3c0] sm:$0xff]
    %v1075 = vld [vmem:[#allocation10 + $0x3c8] sm:$0xff]
    %v1076 = vld [vmem:[#allocation10 + $0x3d0] sm:$0xff]
    %v1077 = vld [vmem:[#allocation10 + $0x3d8] sm:$0xff]
    %v1078 = vld [vmem:[#allocation10 + $0x3e0] sm:$0xff]
    %v1079 = vld [vmem:[#allocation10 + $0x3e8] sm:$0xff]
    %v1080 = vld [vmem:[#allocation10 + $0x3f0] sm:$0xff]
    %v1081 = vld [vmem:[#allocation10 + $0x3f8] sm:$0xff]
    %v1082 = vld [vmem:[#allocation10 + $0x400] sm:$0xff]
    %v1083 = vld [vmem:[#allocation10 + $0x408] sm:$0xff]
    %v1084 = vld [vmem:[#allocation10 + $0x410] sm:$0xff]
    %v1085 = vld [vmem:[#allocation10 + $0x418] sm:$0xff]
    %v1086 = vld [vmem:[#allocation10 + $0x420] sm:$0xff]
    %v1087 = vld [vmem:[#allocation10 + $0x428] sm:$0xff]
    %v1088 = vld [vmem:[#allocation10 + $0x430] sm:$0xff]
    %v1089 = vld [vmem:[#allocation10 + $0x438] sm:$0xff]
    %v1090 = vld [vmem:[#allocation10 + $0x440] sm:$0xff]
    %v1091 = vld [vmem:[#allocation10 + $0x448] sm:$0xff]
    %v1092 = vld [vmem:[#allocation10 + $0x450] sm:$0xff]
    %v1093 = vld [vmem:[#allocation10 + $0x458] sm:$0xff]
    %v1094 = vld [vmem:[#allocation10 + $0x460] sm:$0xff]
    %v1095 = vld [vmem:[#allocation10 + $0x468] sm:$0xff]
    %v1096 = vld [vmem:[#allocation10 + $0x470] sm:$0xff]
    %v1097 = vld [vmem:[#allocation10 + $0x478] sm:$0xff]
    %v1098 = vld [vmem:[%s4] sm:$0x1]
    %v1100 = vperm.slane %v1098, 0
    %1102 = vmatpush.msra.mxu0 %v969
    %1103 = vmatpush.msra.mxu0 %v968
    %1104 = vmatpush.msra.mxu0 %v967
    %1105 = vmatpush.msra.mxu0 %v966
    %1106 = vmatpush.msra.mxu0 %v965
    %1107 = vmatpush.msra.mxu0 %v964
    %1108 = vmatpush.msra.mxu0 %v963
    %1109 = vmatpush.msra.mxu0 %v962
    %1110 = vmatpush.msra.mxu0 %v961
    %1111 = vmatpush.msra.mxu0 %v960
    %1112 = vmatpush.msra.mxu0 %v959
    %1113 = vmatpush.msra.mxu0 %v958
    %1114 = vmatpush.msra.mxu0 %v957
    %1115 = vmatpush.msra.mxu0 %v956
    %1116 = vmatpush.msra.mxu0 %v955
    %1117 = vmatpush.msra.mxu0 %v954
    %1118 = vmatmul.f32.gmra.mxu0 %v945
    %v1119 = vpop.f32.mrf.mxu0
    %v1120 = vadd.f32 %v1100, %v1119
    %1121 = vdwg.mxu0
    %1122 = vmatpush.msra.mxu0 %v985
    %1123 = vmatpush.msra.mxu0 %v984
    %1124 = vmatpush.msra.mxu0 %v983
    %1125 = vmatpush.msra.mxu0 %v982
    %1126 = vmatpush.msra.mxu0 %v981
    %1127 = vmatpush.msra.mxu0 %v980
    %1128 = vmatpush.msra.mxu0 %v979
    %1129 = vmatpush.msra.mxu0 %v978
    %1130 = vmatpush.msra.mxu0 %v977
    %1131 = vmatpush.msra.mxu0 %v976
    %1132 = vmatpush.msra.mxu0 %v975
    %1133 = vmatpush.msra.mxu0 %v974
    %1134 = vmatpush.msra.mxu0 %v973
    %1135 = vmatpush.msra.mxu0 %v972
    %1136 = vmatpush.msra.mxu0 %v971
    %1137 = vmatpush.msra.mxu0 %v970
    %1138 = vmatmul.f32.gmra.mxu0 %v946
    %v1139 = vpop.f32.mrf.mxu0
    %v1140 = vadd.f32 %v1120, %v1139
    %1141 = vdwg.mxu0
    %1142 = vmatpush.msra.mxu0 %v1001
    %1143 = vmatpush.msra.mxu0 %v1000
    %1144 = vmatpush.msra.mxu0 %v999
    %1145 = vmatpush.msra.mxu0 %v998
    %1146 = vmatpush.msra.mxu0 %v997
    %1147 = vmatpush.msra.mxu0 %v996
    %1148 = vmatpush.msra.mxu0 %v995
    %1149 = vmatpush.msra.mxu0 %v994
    %1150 = vmatpush.msra.mxu0 %v993
    %1151 = vmatpush.msra.mxu0 %v992
    %1152 = vmatpush.msra.mxu0 %v991
    %1153 = vmatpush.msra.mxu0 %v990
    %1154 = vmatpush.msra.mxu0 %v989
    %1155 = vmatpush.msra.mxu0 %v988
    %1156 = vmatpush.msra.mxu0 %v987
    %1157 = vmatpush.msra.mxu0 %v986
    %1158 = vmatmul.f32.gmra.mxu0 %v947
    %v1159 = vpop.f32.mrf.mxu0
    %v1160 = vadd.f32 %v1140, %v1159
    %1161 = vdwg.mxu0
    %1162 = vmatpush.msra.mxu0 %v1017
    %1163 = vmatpush.msra.mxu0 %v1016
    %1164 = vmatpush.msra.mxu0 %v1015
    %1165 = vmatpush.msra.mxu0 %v1014
    %1166 = vmatpush.msra.mxu0 %v1013
    %1167 = vmatpush.msra.mxu0 %v1012
    %1168 = vmatpush.msra.mxu0 %v1011
    %1169 = vmatpush.msra.mxu0 %v1010
    %1170 = vmatpush.msra.mxu0 %v1009
    %1171 = vmatpush.msra.mxu0 %v1008
    %1172 = vmatpush.msra.mxu0 %v1007
    %1173 = vmatpush.msra.mxu0 %v1006
    %1174 = vmatpush.msra.mxu0 %v1005
    %1175 = vmatpush.msra.mxu0 %v1004
    %1176 = vmatpush.msra.mxu0 %v1003
    %1177 = vmatpush.msra.mxu0 %v1002
    %1178 = vmatmul.f32.gmra.mxu0 %v948
    %v1179 = vpop.f32.mrf.mxu0
    %v1180 = vadd.f32 %v1160, %v1179
    %1181 = vdwg.mxu0
    %1182 = vmatpush.msra.mxu0 %v1033
    %1183 = vmatpush.msra.mxu0 %v1032
    %1184 = vmatpush.msra.mxu0 %v1031
    %1185 = vmatpush.msra.mxu0 %v1030
    %1186 = vmatpush.msra.mxu0 %v1029
    %1187 = vmatpush.msra.mxu0 %v1028
    %1188 = vmatpush.msra.mxu0 %v1027
    %1189 = vmatpush.msra.mxu0 %v1026
    %1190 = vmatpush.msra.mxu0 %v1025
    %1191 = vmatpush.msra.mxu0 %v1024
    %1192 = vmatpush.msra.mxu0 %v1023
    %1193 = vmatpush.msra.mxu0 %v1022
    %1194 = vmatpush.msra.mxu0 %v1021
    %1195 = vmatpush.msra.mxu0 %v1020
    %1196 = vmatpush.msra.mxu0 %v1019
    %1197 = vmatpush.msra.mxu0 %v1018
    %1198 = vmatmul.f32.gmra.mxu0 %v949
    %v1199 = vpop.f32.mrf.mxu0
    %v1200 = vadd.f32 %v1180, %v1199
    %1201 = vdwg.mxu0
    %1202 = vmatpush.msra.mxu0 %v1049
    %1203 = vmatpush.msra.mxu0 %v1048
    %1204 = vmatpush.msra.mxu0 %v1047
    %1205 = vmatpush.msra.mxu0 %v1046
    %1206 = vmatpush.msra.mxu0 %v1045
    %1207 = vmatpush.msra.mxu0 %v1044
    %1208 = vmatpush.msra.mxu0 %v1043
    %1209 = vmatpush.msra.mxu0 %v1042
    %1210 = vmatpush.msra.mxu0 %v1041
    %1211 = vmatpush.msra.mxu0 %v1040
    %1212 = vmatpush.msra.mxu0 %v1039
    %1213 = vmatpush.msra.mxu0 %v1038
    %1214 = vmatpush.msra.mxu0 %v1037
    %1215 = vmatpush.msra.mxu0 %v1036
    %1216 = vmatpush.msra.mxu0 %v1035
    %1217 = vmatpush.msra.mxu0 %v1034
    %1218 = vmatmul.f32.gmra.mxu0 %v950
    %v1219 = vpop.f32.mrf.mxu0
    %v1220 = vadd.f32 %v1200, %v1219
    %1221 = vdwg.mxu0
    %1222 = vmatpush.msra.mxu0 %v1065
    %1223 = vmatpush.msra.mxu0 %v1064
    %1224 = vmatpush.msra.mxu0 %v1063
    %1225 = vmatpush.msra.mxu0 %v1062
    %1226 = vmatpush.msra.mxu0 %v1061
    %1227 = vmatpush.msra.mxu0 %v1060
    %1228 = vmatpush.msra.mxu0 %v1059
    %1229 = vmatpush.msra.mxu0 %v1058
    %1230 = vmatpush.msra.mxu0 %v1057
    %1231 = vmatpush.msra.mxu0 %v1056
    %1232 = vmatpush.msra.mxu0 %v1055
    %1233 = vmatpush.msra.mxu0 %v1054
    %1234 = vmatpush.msra.mxu0 %v1053
    %1235 = vmatpush.msra.mxu0 %v1052
    %1236 = vmatpush.msra.mxu0 %v1051
    %1237 = vmatpush.msra.mxu0 %v1050
    %1238 = vmatmul.f32.gmra.mxu0 %v951
    %v1239 = vpop.f32.mrf.mxu0
    %v1240 = vadd.f32 %v1220, %v1239
    %1241 = vdwg.mxu0
    %1242 = vmatpush.msra.mxu0 %v1081
    %1243 = vmatpush.msra.mxu0 %v1080
    %1244 = vmatpush.msra.mxu0 %v1079
    %1245 = vmatpush.msra.mxu0 %v1078
    %1246 = vmatpush.msra.mxu0 %v1077
    %1247 = vmatpush.msra.mxu0 %v1076
    %1248 = vmatpush.msra.mxu0 %v1075
    %1249 = vmatpush.msra.mxu0 %v1074
    %1250 = vmatpush.msra.mxu0 %v1073
    %1251 = vmatpush.msra.mxu0 %v1072
    %1252 = vmatpush.msra.mxu0 %v1071
    %1253 = vmatpush.msra.mxu0 %v1070
    %1254 = vmatpush.msra.mxu0 %v1069
    %1255 = vmatpush.msra.mxu0 %v1068
    %1256 = vmatpush.msra.mxu0 %v1067
    %1257 = vmatpush.msra.mxu0 %v1066
    %1258 = vmatmul.f32.gmra.mxu0 %v952
    %v1259 = vpop.f32.mrf.mxu0
    %v1260 = vadd.f32 %v1240, %v1259
    %1261 = vdwg.mxu0
    %1262 = vmatpush.msra.mxu0 %v1097
    %1263 = vmatpush.msra.mxu0 %v1096
    %1264 = vmatpush.msra.mxu0 %v1095
    %1265 = vmatpush.msra.mxu0 %v1094
    %1266 = vmatpush.msra.mxu0 %v1093
    %1267 = vmatpush.msra.mxu0 %v1092
    %1268 = vmatpush.msra.mxu0 %v1091
    %1269 = vmatpush.msra.mxu0 %v1090
    %1270 = vmatpush.msra.mxu0 %v1089
    %1271 = vmatpush.msra.mxu0 %v1088
    %1272 = vmatpush.msra.mxu0 %v1087
    %1273 = vmatpush.msra.mxu0 %v1086
    %1274 = vmatpush.msra.mxu0 %v1085
    %1275 = vmatpush.msra.mxu0 %v1084
    %1276 = vmatpush.msra.mxu0 %v1083
    %1277 = vmatpush.msra.mxu0 %v1082
    %1278 = vmatmul.f32.gmra.mxu0 %v953
    %v1279 = vpop.f32.mrf.mxu0
    %v1280 = vadd.f32 %v1260, %v1279
    %1281 = vdwg.mxu0
    %vm1282 = vcmp.ge.f32.partialorder %v1280, 0.0
    %v1283 = vmul.f32 %v1280, 0.02
    %v1284 = vsel %vm1282, %v1280, %v1283
    %v1285 = vld [vmem:[#allocation12] sm:$0xff]
    %v1286 = vld [vmem:[#allocation12 + $0x8] sm:$0xff]
    %v1287 = vld [vmem:[#allocation12 + $0x10] sm:$0xff]
    %v1288 = vld [vmem:[#allocation12 + $0x18] sm:$0xff]
    %v1289 = vld [vmem:[#allocation12 + $0x20] sm:$0xff]
    %v1290 = vld [vmem:[#allocation12 + $0x28] sm:$0xff]
    %v1291 = vld [vmem:[#allocation12 + $0x30] sm:$0xff]
    %v1292 = vld [vmem:[#allocation12 + $0x38] sm:$0xff]
    %v1293 = vld [vmem:[#allocation12 + $0x40] sm:$0xff]
    %v1294 = vld [vmem:[#allocation12 + $0x48] sm:$0xff]
    %v1295 = vld [vmem:[#allocation12 + $0x50] sm:$0xff]
    %v1296 = vld [vmem:[#allocation12 + $0x58] sm:$0xff]
    %v1297 = vld [vmem:[#allocation12 + $0x60] sm:$0xff]
    %v1298 = vld [vmem:[#allocation12 + $0x68] sm:$0xff]
    %v1299 = vld [vmem:[#allocation12 + $0x70] sm:$0xff]
    %v1300 = vld [vmem:[#allocation12 + $0x78] sm:$0xff]
    %v1301 = vld [vmem:[%s6] sm:$0x1]
    %v1303 = vperm.slane %v1301, 0
    %1305 = vmatpush.msra.mxu0 %v1300
    %1306 = vmatpush.msra.mxu0 %v1299
    %1307 = vmatpush.msra.mxu0 %v1298
    %1308 = vmatpush.msra.mxu0 %v1297
    %1309 = vmatpush.msra.mxu0 %v1296
    %1310 = vmatpush.msra.mxu0 %v1295
    %1311 = vmatpush.msra.mxu0 %v1294
    %1312 = vmatpush.msra.mxu0 %v1293
    %1313 = vmatpush.msra.mxu0 %v1292
    %1314 = vmatpush.msra.mxu0 %v1291
    %1315 = vmatpush.msra.mxu0 %v1290
    %1316 = vmatpush.msra.mxu0 %v1289
    %1317 = vmatpush.msra.mxu0 %v1288
    %1318 = vmatpush.msra.mxu0 %v1287
    %1319 = vmatpush.msra.mxu0 %v1286
    %1320 = vmatpush.msra.mxu0 %v1285
    %1321 = vmatmul.f32.gmra.mxu0 %v1284
    %v1322 = vpop.f32.mrf.mxu0
    %v1323 = vadd.f32 %v1303, %v1322
    %1324 = vdwg.mxu0
    %vm1325 = vcmp.ge.f32.partialorder %v1323, 0.0
    %v1326 = vmul.f32 %v1323, 0.02
    %v1327 = vsel %vm1325, %v1323, %v1326
    %v1328 = vld [vmem:[#allocation13] sm:$0xff]
    %v1329 = vld [vmem:[#allocation13 + $0x8] sm:$0xff]
    %v1330 = vld [vmem:[#allocation13 + $0x10] sm:$0xff]
    %v1331 = vld [vmem:[#allocation13 + $0x18] sm:$0xff]
    %v1332 = vld [vmem:[#allocation13 + $0x20] sm:$0xff]
    %v1333 = vld [vmem:[#allocation13 + $0x28] sm:$0xff]
    %v1334 = vld [vmem:[#allocation13 + $0x30] sm:$0xff]
    %v1335 = vld [vmem:[#allocation13 + $0x38] sm:$0xff]
    %v1336 = vld [vmem:[#allocation13 + $0x40] sm:$0xff]
    %v1337 = vld [vmem:[#allocation13 + $0x48] sm:$0xff]
    %v1338 = vld [vmem:[#allocation13 + $0x50] sm:$0xff]
    %v1339 = vld [vmem:[#allocation13 + $0x58] sm:$0xff]
    %v1340 = vld [vmem:[#allocation13 + $0x60] sm:$0xff]
    %v1341 = vld [vmem:[#allocation13 + $0x68] sm:$0xff]
    %v1342 = vld [vmem:[#allocation13 + $0x70] sm:$0xff]
    %v1343 = vld [vmem:[#allocation13 + $0x78] sm:$0xff]
    %v1344 = vld [vmem:[%s8] sm:$0x1]
    %v1346 = vperm.slane %v1344, 0
    %1348 = vmatpush.msra.mxu0 %v1343
    %1349 = vmatpush.msra.mxu0 %v1342
    %1350 = vmatpush.msra.mxu0 %v1341
    %1351 = vmatpush.msra.mxu0 %v1340
    %1352 = vmatpush.msra.mxu0 %v1339
    %1353 = vmatpush.msra.mxu0 %v1338
    %1354 = vmatpush.msra.mxu0 %v1337
    %1355 = vmatpush.msra.mxu0 %v1336
    %1356 = vmatpush.msra.mxu0 %v1335
    %1357 = vmatpush.msra.mxu0 %v1334
    %1358 = vmatpush.msra.mxu0 %v1333
    %1359 = vmatpush.msra.mxu0 %v1332
    %1360 = vmatpush.msra.mxu0 %v1331
    %1361 = vmatpush.msra.mxu0 %v1330
    %1362 = vmatpush.msra.mxu0 %v1329
    %1363 = vmatpush.msra.mxu0 %v1328
    %1364 = vmatmul.f32.gmra.mxu0 %v1327
    %v1365 = vpop.f32.mrf.mxu0
    %v1366 = vadd.f32 %v1346, %v1365
    %1367 = vdwg.mxu0
    %vm1368 = vcmp.ge.f32.partialorder %v1366, 0.0
    %v1369 = vmul.f32 %v1366, 0.02
    %v1370 = vsel %vm1368, %v1366, %v1369
    %v1371 = vld [vmem:[%s9] sm:$0x1]
    %v1372 = vld [vmem:[#allocation3] sm:$0x1]
    %1374 = vset.pattern.permute.xlu0 0
    %1375 = vperm.xlu0 %1374, %v1372
    %v1376 = vpop.permute.xlu0 %1375
    %v1378 = vperm.slane %v1376, 0
    %1379 = vmatpush.xpose.msra.mxu0 0.0
    %1380 = vmatpush.xpose.msra.mxu0 0.0
    %1381 = vmatpush.xpose.msra.mxu0 0.0
    %1382 = vmatpush.xpose.msra.mxu0 0.0
    %1383 = vmatpush.xpose.msra.mxu0 0.0
    %1384 = vmatpush.xpose.msra.mxu0 0.0
    %1385 = vmatpush.xpose.msra.mxu0 0.0
    %1386 = vmatpush.xpose.msra.mxu0 0.0
    %1387 = vmatpush.xpose.msra.mxu0 0.0
    %1388 = vmatpush.xpose.msra.mxu0 0.0
    %1389 = vmatpush.xpose.msra.mxu0 0.0
    %1390 = vmatpush.xpose.msra.mxu0 0.0
    %1391 = vmatpush.xpose.msra.mxu0 0.0
    %1392 = vmatpush.xpose.msra.mxu0 0.0
    %1393 = vmatpush.xpose.msra.mxu0 0.0
    %1394 = vmatpush.xpose.msra.mxu0 %v1370
    %1395 = vmatmul.f32.gmra.mxu0 %v1371
    %v1396 = vpop.f32.mrf.mxu0
    %v1397 = vadd.f32 %v1378, %v1396
    %1398 = vdwg.mxu0
    %vm1399 = vcmask 57344
    %1400 = vst.msk [vmem:[#allocation15] sm:$0x1] %vm1399, %v1397
    // Predicated region
    $region70: #{tpu_custom_call.1} parent=1 // pred_check
      _
    $region71: #{tpu_custom_call.1} parent=1 // pred_check_branch
      %1402 = sbr.rel (0) target = $region73
    $region72: #{tpu_custom_call.1} parent=1 // pred_region
      %1404 = vsyncadd [#allocation6], 0
      %s1406 = sshll.u32 [#allocation15], 4
      %s1407 = int_to_ptr.vmem [resolvable:$true] %s1406
      %s1408 = sshll.u32 %s11, 4
      %s1409 = int_to_ptr.hbm [resolvable:$true] %s1408
      %1411 = dma.vmem_to_hbm [thread:$0]  %s1407, 16, %s1409, [#allocation6]
    $region73: #{tpu_custom_call.1} parent=1 // pred_fallthru
      _
    // Predicated region
    $region74: #{tpu_custom_call.1} parent=1 // pred_check
      _
    $region75: #{tpu_custom_call.1} parent=1 // pred_check_branch
      %1413 = sbr.rel (0) target = $region77
    $region76: #{tpu_custom_call.1} parent=1 // pred_region
      %1415 = dma.done [#allocation6], 16
    $region77: #{tpu_custom_call.1} parent=1 // pred_fallthru
      _
    %1416 = vsyncpa [#allocation5], 1
    %1417 = vsyncpa [#allocation8], 1
    %1418 = vsyncpa [#allocation11], 1
    %1419 = vsyncpa [#allocation14], 1
    %1420 = vsyncpa [#allocation6], 1

</llo_original>
